<compile_context>
chip_gen: v6e
topology: v6e:2x2x1
jax: 0.10.0
libtpu: 0.0.40
codegen_flags: <defaults>
</compile_context>

<pallas_src>
import functools

import jax
import jax.numpy as jnp
from jax import lax
from jax.experimental import pallas as pl
from jax.experimental.pallas import tpu as pltpu


_HALO = 8          # sublane-aligned halo rows loaded above/below every H tile
_NEG = -1e30       # stands in for -inf when max-pooling values in [0, 1]
_POS = 1e30        # stands in for +inf when min-pooling values in [0, 1]


def _boundary_loss_kernel(pred_core, pred_top, pred_bot,
                          gt_core, gt_top, gt_bot, out_ref,
                          *, theta0, theta, img_h, tile_h):
    pad0 = (theta0 - 1) // 2
    pad1 = (theta - 1) // 2
    max_pad = max(pad0, pad1)
    t = pl.program_id(1)

    def canvas(top, core, bot):
        # (C,8,W) + (C,tile_h,W) + (C,8,W) -> (C, tile_h + 16, W)
        return jnp.concatenate([top[0], core[0], bot[0]], axis=1)

    x = canvas(pred_top, pred_core, pred_bot).astype(jnp.float32)
    g = canvas(gt_top, gt_core, gt_bot).astype(jnp.float32)
    c_dim, s_rows, w = x.shape

    # ---- channel softmax statistics (only max + 1/denominator stay live) ----
    m = x[0]
    for c in range(1, c_dim):
        m = jnp.maximum(m, x[c])
    den = jnp.exp(x[0] - m)
    for c in range(1, c_dim):
        den = den + jnp.exp(x[c] - m)
    inv_den = 1.0 / den

    # ---- row validity: canvas row r maps to global image row t*tile_h-8+r ---
    row0 = t * tile_h - _HALO
    gr = lax.broadcasted_iota(jnp.int32, (s_rows, 1), 0) + row0
    in_img = (gr >= 0) & (gr < img_h)                  # (S, 1)
    in_img_b = in_img[pad0:s_rows - pad0]              # rows of the pool-1 output

    neg = jnp.float32(_NEG)
    pos = jnp.float32(_POS)

    # ---- 'same' pooling along W (lane axis) ----------------------------------
    if w % 128 == 0:
        # pltpu.roll (XLU) + hoisted wrap masks.  Masks are derived from a
        # rolled iota, so they are correct regardless of the roll direction
        # convention: wrapped lanes have |src_col - col| == W - d != d.
        col = lax.broadcasted_iota(jnp.int32, (1, w), 1)
        keep = {}
        for d in range(1, max_pad + 1):
            for s in (d, w - d):
                keep[s] = jnp.abs(pltpu.roll(col, s, axis=1) - col) == d

        def same_pool_w(a, pad, fill, op):
            out = a
            for d in range(1, pad + 1):
                for s in (d, w - d):
                    out = op(out, jnp.where(keep[s], pltpu.roll(a, s, axis=1), fill))
            return out
    else:
        # Small / lane-unaligned W fallback: slice + concat shifts.
        def same_pool_w(a, pad, fill, op):
            out = a
            for d in range(1, pad + 1):
                blk = jnp.full((a.shape[0], d), fill, dtype=a.dtype)
                out = op(out, jnp.concatenate([a[:, d:], blk], axis=1))       # x[j+d]
                out = op(out, jnp.concatenate([blk, a[:, :w - d]], axis=1))   # x[j-d]
            return out

    # ---- 'valid' pooling along H (sublane axis): plain static slices --------
    def valid_pool_h(a, k, op):
        n_out = a.shape[0] - (k - 1)
        acc = a[0:n_out]
        for d in range(1, k):
            acc = op(acc, a[d:d + n_out])
        return acc

    def boundary_and_ext(q):
        """q: (S, W) values in [0, 1].  Returns (b, b_ext) with
        b     = q - 'same'-minpool_theta0(q)   ( == maxpool(1-q) - (1-q) )
        b_ext = 'same'-maxpool_theta(b)
        Out-of-image rows/cols are treated as +inf (min pool) / -inf (max
        pool), reproducing PyTorch max_pool2d's implicit -inf padding."""
        v = jnp.where(in_img, q, pos)
        mn = valid_pool_h(v, theta0, jnp.minimum)
        mn = same_pool_w(mn, pad0, pos, jnp.minimum)
        b = jnp.where(in_img_b, v[pad0:s_rows - pad0] - mn, neg)
        bx = valid_pool_h(b, theta, jnp.maximum)
        bx = same_pool_w(bx, pad1, neg, jnp.maximum)
        return b, bx

    off_b = _HALO - pad0           # this tile's rows inside b
    off_e = _HALO - pad0 - pad1    # this tile's rows inside b_ext

    # ---- per-channel boundary maps + column partial sums ---------------------
    for c in range(c_dim):
        p_c = jnp.exp(x[c] - m) * inv_den            # softmax prob, channel c
        pb, pbx = boundary_and_ext(p_c)
        gb, gbx = boundary_and_ext(g[c])

        pb_t = pb[off_b:off_b + tile_h]
        gb_t = gb[off_b:off_b + tile_h]
        pbx_t = pbx[off_e:off_e + tile_h]
        gbx_t = gbx[off_e:off_e + tile_h]

        s_pg = jnp.sum(pb_t * gbx_t, axis=0, keepdims=True)    # (1, W)
        s_p = jnp.sum(pb_t, axis=0, keepdims=True)
        s_gp = jnp.sum(pbx_t * gb_t, axis=0, keepdims=True)
        s_g = jnp.sum(gb_t, axis=0, keepdims=True)

        out_ref[0, 0, c] = jnp.concatenate([s_pg, s_p, s_gp, s_g], axis=0)


def _auto_tile_h(h, w, c, budget_bytes=16 * 1024 * 1024):
    """Largest multiple-of-8 divisor of H whose per-step footprint
    (double-buffered inputs + canvases + live planes) fits the VMEM budget."""
    bytes_per_row = (6 * c + 10) * w * 4
    max_rows = max(8, budget_bytes // bytes_per_row - 2 * _HALO)
    best, cand = 8, 8
    while cand <= min(h, max_rows):
        if h % cand == 0:
            best = cand
        cand += 8
    return best


def boundary_loss_pallas(pred, one_hot_gt, *, theta0=3, theta=5, eps=1e-7,
                         tile_h=None):
    assert pred.shape == one_hot_gt.shape and pred.ndim == 4
    assert theta0 % 2 == 1 and theta % 2 == 1, "stride-1 'same' pooling needs odd kernels"
    n, c, h, w = pred.shape
    pad0, pad1 = (theta0 - 1) // 2, (theta - 1) // 2
    assert pad0 + pad1 <= _HALO, "pooling halo must fit in the 8-row neighbour blocks"
    # TODO(synk): support H not divisible by 8 (needs in-kernel row padding of the canvas).
    assert h % 8 == 0, "H must be a multiple of 8"

    if tile_h is None:
        tile_h = _auto_tile_h(h, w, c)
    assert tile_h % 8 == 0 and h % tile_h == 0
    n_tiles = h // tile_h
    bh = tile_h // 8          # core tile size in 8-row blocks
    hb = h // 8               # number of 8-row blocks along H

    kernel = functools.partial(_boundary_loss_kernel, theta0=theta0,
                               theta=theta, img_h=h, tile_h=tile_h)

    core_spec = pl.BlockSpec((1, c, tile_h, w), lambda i, t: (i, 0, t, 0))
    top_spec = pl.BlockSpec((1, c, 8, w),
                            lambda i, t: (i, 0, jnp.maximum(t * bh - 1, 0), 0))
    bot_spec = pl.BlockSpec((1, c, 8, w),
                            lambda i, t: (i, 0, jnp.minimum((t + 1) * bh, hb - 1), 0))

    partial_sums = pl.pallas_call(
        kernel,
        grid=(n, n_tiles),
        in_specs=[core_spec, top_spec, bot_spec,       # pred  (core / halo above / halo below)
                  core_spec, top_spec, bot_spec],      # gt
        out_specs=pl.BlockSpec((1, 1, c, 4, w), lambda i, t: (i, t, 0, 0, 0)),
        out_shape=jax.ShapeDtypeStruct((n, n_tiles, c, 4, w), jnp.float32),
        compiler_params=pltpu.CompilerParams(
            dimension_semantics=("parallel", "parallel"),   # batch and H-tiles independent
            vmem_limit_bytes=32 * 1024 * 1024,              # safe on v5e/v6e/v7x; tile_h keeps us well under
        ),
    )(pred, pred, pred, one_hot_gt, one_hot_gt, one_hot_gt)

    # Tiny epilogue: fold tiles + columns, then P / R / BF1 per (n, c).
    sums = jnp.sum(partial_sums, axis=(1, 4))          # (N, C, 4)
    s_pg, s_p, s_gp, s_g = sums[..., 0], sums[..., 1], sums[..., 2], sums[..., 3]
    precision = s_pg / (s_p + eps)
    recall = s_gp / (s_g + eps)
    bf1 = 2.0 * precision * recall / (precision + recall + eps)
    return jnp.mean(1.0 - bf1)


def boundary_loss_reference(pred, one_hot_gt, *, theta0=3, theta=5, eps=1e-7):
    """Pure-JAX reference matching the PyTorch forward."""
    n, c = pred.shape[:2]
    p = jax.nn.softmax(pred, axis=1)

    def mp(x, k):
        pad = (k - 1) // 2
        return lax.reduce_window(
            x, -jnp.inf, lax.max,
            window_dimensions=(1, 1, k, k),
            window_strides=(1, 1, 1, 1),
            padding=((0, 0), (0, 0), (pad, k - 1 - pad), (pad, k - 1 - pad)))

    gt_b = mp(1.0 - one_hot_gt, theta0) - (1.0 - one_hot_gt)
    pred_b = mp(1.0 - p, theta0) - (1.0 - p)
    gt_b_ext = mp(gt_b, theta)
    pred_b_ext = mp(pred_b, theta)

    gt_b = gt_b.reshape(n, c, -1)
    pred_b = pred_b.reshape(n, c, -1)
    gt_b_ext = gt_b_ext.reshape(n, c, -1)
    pred_b_ext = pred_b_ext.reshape(n, c, -1)

    P = jnp.sum(pred_b * gt_b_ext, axis=2) / (jnp.sum(pred_b, axis=2) + eps)
    R = jnp.sum(pred_b_ext * gt_b, axis=2) / (jnp.sum(gt_b, axis=2) + eps)
    BF1 = 2.0 * P * R / (P + R + eps)
    return jnp.mean(1.0 - BF1)


if __name__ == "__main__":
    key = jax.random.PRNGKey(0)

    def run_case(n, c, h, w, tile_h=None):
        k1, k2 = jax.random.split(jax.random.fold_in(key, n * 1000 + c * 100 + h + w))
        pred = jax.random.normal(k1, (n, c, h, w), dtype=jnp.float32)
        labels = jax.random.randint(k2, (n, h, w), 0, c)
        one_hot = jnp.transpose(jax.nn.one_hot(labels, c, dtype=jnp.float32),
                                (0, 3, 1, 2))                        # (N, C, H, W)
        loss = jax.block_until_ready(boundary_loss_pallas(pred, one_hot, tile_h=tile_h))
        ref = boundary_loss_reference(pred, one_hot)
        assert jnp.allclose(loss, ref, rtol=1e-4, atol=1e-4), (loss, ref)

    # Multi-tile halo path + lane-unaligned-W fallback pooling.
    run_case(2, 4, 16, 16, tile_h=8)
    # Lane-aligned W: exercises the pltpu.roll 'same'-pool path across 4 H-tiles.
    run_case(1, 3, 32, 128, tile_h=8)

    print("KERNEL_OK")
</pallas_src>

<mosaic_0001>
module attributes {stable_mosaic.version = 11 : i64} {
  func.func @_boundary_loss_kernel(%arg0: i32, %arg1: i32, %arg2: memref<1x4x8x16xf32, #tpu.memory_space<vmem>>, %arg3: memref<1x4x8x16xf32, #tpu.memory_space<vmem>>, %arg4: memref<1x4x8x16xf32, #tpu.memory_space<vmem>>, %arg5: memref<1x4x8x16xf32, #tpu.memory_space<vmem>>, %arg6: memref<1x4x8x16xf32, #tpu.memory_space<vmem>>, %arg7: memref<1x4x8x16xf32, #tpu.memory_space<vmem>>, %arg8: memref<1x1x4x4x16xf32, #tpu.memory_space<vmem>>) attributes {dimension_semantics = [#tpu.dimension_semantics<parallel>, #tpu.dimension_semantics<parallel>], iteration_bounds = array<i64: 2, 2>, scalar_prefetch = 0 : i64, scratch_operands = 0 : i64, tpu.core_type = #tpu.core_type<tc>, window_params = [{transform_indices = @transform_0, window_bounds = array<i64: 1, 4, 8, 16>}, {transform_indices = @transform_1, window_bounds = array<i64: 1, 4, 8, 16>}, {transform_indices = @transform_2, window_bounds = array<i64: 1, 4, 8, 16>}, {transform_indices = @transform_3, window_bounds = array<i64: 1, 4, 8, 16>}, {transform_indices = @transform_4, window_bounds = array<i64: 1, 4, 8, 16>}, {transform_indices = @transform_5, window_bounds = array<i64: 1, 4, 8, 16>}, {transform_indices = @transform_6, window_bounds = array<i64: 1, 1, 4, 4, 16>}]} {
    %c0 = arith.constant 0 : index
    %c0_0 = arith.constant 0 : index
    %c0_1 = arith.constant 0 : index
    %c0_2 = arith.constant 0 : index
    %0 = vector.load %arg3[%c0, %c0_0, %c0_1, %c0_2] : memref<1x4x8x16xf32, #tpu.memory_space<vmem>>, vector<1x4x8x16xf32>
    %1 = vector.shape_cast %0 : vector<1x4x8x16xf32> to vector<4x8x16xf32>
    %c0_3 = arith.constant 0 : index
    %c0_4 = arith.constant 0 : index
    %c0_5 = arith.constant 0 : index
    %c0_6 = arith.constant 0 : index
    %2 = vector.load %arg2[%c0_3, %c0_4, %c0_5, %c0_6] : memref<1x4x8x16xf32, #tpu.memory_space<vmem>>, vector<1x4x8x16xf32>
    %3 = vector.shape_cast %2 : vector<1x4x8x16xf32> to vector<4x8x16xf32>
    %c0_7 = arith.constant 0 : index
    %c0_8 = arith.constant 0 : index
    %c0_9 = arith.constant 0 : index
    %c0_10 = arith.constant 0 : index
    %4 = vector.load %arg4[%c0_7, %c0_8, %c0_9, %c0_10] : memref<1x4x8x16xf32, #tpu.memory_space<vmem>>, vector<1x4x8x16xf32>
    %5 = vector.shape_cast %4 : vector<1x4x8x16xf32> to vector<4x8x16xf32>
    %6 = tpu.concatenate %1, %3, %5 in 1 : vector<4x8x16xf32>, vector<4x8x16xf32>, vector<4x8x16xf32> -> vector<4x24x16xf32>
    %c0_11 = arith.constant 0 : index
    %c0_12 = arith.constant 0 : index
    %c0_13 = arith.constant 0 : index
    %c0_14 = arith.constant 0 : index
    %7 = vector.load %arg6[%c0_11, %c0_12, %c0_13, %c0_14] : memref<1x4x8x16xf32, #tpu.memory_space<vmem>>, vector<1x4x8x16xf32>
    %8 = vector.shape_cast %7 : vector<1x4x8x16xf32> to vector<4x8x16xf32>
    %c0_15 = arith.constant 0 : index
    %c0_16 = arith.constant 0 : index
    %c0_17 = arith.constant 0 : index
    %c0_18 = arith.constant 0 : index
    %9 = vector.load %arg5[%c0_15, %c0_16, %c0_17, %c0_18] : memref<1x4x8x16xf32, #tpu.memory_space<vmem>>, vector<1x4x8x16xf32>
    %10 = vector.shape_cast %9 : vector<1x4x8x16xf32> to vector<4x8x16xf32>
    %c0_19 = arith.constant 0 : index
    %c0_20 = arith.constant 0 : index
    %c0_21 = arith.constant 0 : index
    %c0_22 = arith.constant 0 : index
    %11 = vector.load %arg7[%c0_19, %c0_20, %c0_21, %c0_22] : memref<1x4x8x16xf32, #tpu.memory_space<vmem>>, vector<1x4x8x16xf32>
    %12 = vector.shape_cast %11 : vector<1x4x8x16xf32> to vector<4x8x16xf32>
    %13 = tpu.concatenate %8, %10, %12 in 1 : vector<4x8x16xf32>, vector<4x8x16xf32>, vector<4x8x16xf32> -> vector<4x24x16xf32>
    %14 = vector.extract_strided_slice %6 {offsets = [0, 0, 0], sizes = [1, 24, 16], strides = [1, 1, 1]} : vector<4x24x16xf32> to vector<1x24x16xf32>
    %15 = vector.shape_cast %14 : vector<1x24x16xf32> to vector<24x16xf32>
    %16 = vector.extract_strided_slice %6 {offsets = [1, 0, 0], sizes = [1, 24, 16], strides = [1, 1, 1]} : vector<4x24x16xf32> to vector<1x24x16xf32>
    %17 = vector.shape_cast %16 : vector<1x24x16xf32> to vector<24x16xf32>
    %18 = arith.maximumf %15, %17 : vector<24x16xf32>
    %19 = vector.extract_strided_slice %6 {offsets = [2, 0, 0], sizes = [1, 24, 16], strides = [1, 1, 1]} : vector<4x24x16xf32> to vector<1x24x16xf32>
    %20 = vector.shape_cast %19 : vector<1x24x16xf32> to vector<24x16xf32>
    %21 = arith.maximumf %18, %20 : vector<24x16xf32>
    %22 = vector.extract_strided_slice %6 {offsets = [3, 0, 0], sizes = [1, 24, 16], strides = [1, 1, 1]} : vector<4x24x16xf32> to vector<1x24x16xf32>
    %23 = vector.shape_cast %22 : vector<1x24x16xf32> to vector<24x16xf32>
    %24 = arith.maximumf %21, %23 : vector<24x16xf32>
    %25 = vector.extract_strided_slice %6 {offsets = [0, 0, 0], sizes = [1, 24, 16], strides = [1, 1, 1]} : vector<4x24x16xf32> to vector<1x24x16xf32>
    %26 = vector.shape_cast %25 : vector<1x24x16xf32> to vector<24x16xf32>
    %27 = arith.subf %26, %24 : vector<24x16xf32>
    %28 = math.exp %27 : vector<24x16xf32>
    %29 = vector.extract_strided_slice %6 {offsets = [1, 0, 0], sizes = [1, 24, 16], strides = [1, 1, 1]} : vector<4x24x16xf32> to vector<1x24x16xf32>
    %30 = vector.shape_cast %29 : vector<1x24x16xf32> to vector<24x16xf32>
    %31 = arith.subf %30, %24 : vector<24x16xf32>
    %32 = math.exp %31 : vector<24x16xf32>
    %33 = arith.addf %28, %32 : vector<24x16xf32>
    %34 = vector.extract_strided_slice %6 {offsets = [2, 0, 0], sizes = [1, 24, 16], strides = [1, 1, 1]} : vector<4x24x16xf32> to vector<1x24x16xf32>
    %35 = vector.shape_cast %34 : vector<1x24x16xf32> to vector<24x16xf32>
    %36 = arith.subf %35, %24 : vector<24x16xf32>
    %37 = math.exp %36 : vector<24x16xf32>
    %38 = arith.addf %33, %37 : vector<24x16xf32>
    %39 = vector.extract_strided_slice %6 {offsets = [3, 0, 0], sizes = [1, 24, 16], strides = [1, 1, 1]} : vector<4x24x16xf32> to vector<1x24x16xf32>
    %40 = vector.shape_cast %39 : vector<1x24x16xf32> to vector<24x16xf32>
    %41 = arith.subf %40, %24 : vector<24x16xf32>
    %42 = math.exp %41 : vector<24x16xf32>
    %43 = arith.addf %38, %42 : vector<24x16xf32>
    %cst = arith.constant 1.000000e+00 : f32
    %44 = vector.broadcast %cst : f32 to vector<24x16xf32>
    %45 = arith.divf %44, %43 : vector<24x16xf32>
    %c8_i32 = arith.constant 8 : i32
    %46 = arith.muli %arg1, %c8_i32 : i32
    %c8_i32_23 = arith.constant 8 : i32
    %47 = arith.subi %46, %c8_i32_23 : i32
    %48 = tpu.iota {dimensions = array<i32: 0>} : vector<24x1xi32>
    %49 = vector.broadcast %47 : i32 to vector<24x1xi32>
    %50 = arith.addi %48, %49 : vector<24x1xi32>
    %c0_i32 = arith.constant 0 : i32
    %51 = vector.broadcast %c0_i32 : i32 to vector<24x1xi32>
    %52 = arith.cmpi sge, %50, %51 : vector<24x1xi32>
    %c16_i32 = arith.constant 16 : i32
    %53 = vector.broadcast %c16_i32 : i32 to vector<24x1xi32>
    %54 = arith.cmpi slt, %50, %53 : vector<24x1xi32>
    %55 = arith.andi %52, %54 : vector<24x1xi1>
    %56 = vector.extract_strided_slice %55 {offsets = [1, 0], sizes = [22, 1], strides = [1, 1]} : vector<24x1xi1> to vector<22x1xi1>
    %57 = vector.extract_strided_slice %6 {offsets = [0, 0, 0], sizes = [1, 24, 16], strides = [1, 1, 1]} : vector<4x24x16xf32> to vector<1x24x16xf32>
    %58 = vector.shape_cast %57 : vector<1x24x16xf32> to vector<24x16xf32>
    %59 = arith.subf %58, %24 : vector<24x16xf32>
    %60 = math.exp %59 : vector<24x16xf32>
    %61 = arith.mulf %60, %45 : vector<24x16xf32>
    %cst_24 = arith.constant 1.000000e+30 : f32
    %62 = vector.shape_cast %55 : vector<24x1xi1> to vector<24x1xi1>
    %63 = vector.broadcast %62 : vector<24x1xi1> to vector<24x16xi1>
    %64 = vector.broadcast %cst_24 : f32 to vector<24x16xf32>
    %65 = arith.select %63, %61, %64 : vector<24x16xi1>, vector<24x16xf32>
    %66 = vector.extract_strided_slice %65 {offsets = [0, 0], sizes = [22, 16], strides = [1, 1]} : vector<24x16xf32> to vector<22x16xf32>
    %67 = vector.extract_strided_slice %65 {offsets = [1, 0], sizes = [22, 16], strides = [1, 1]} : vector<24x16xf32> to vector<22x16xf32>
    %68 = arith.minimumf %66, %67 : vector<22x16xf32>
    %69 = vector.extract_strided_slice %65 {offsets = [2, 0], sizes = [22, 16], strides = [1, 1]} : vector<24x16xf32> to vector<22x16xf32>
    %70 = arith.minimumf %68, %69 : vector<22x16xf32>
    %cst_25 = arith.constant 1.000000e+30 : f32
    %71 = vector.broadcast %cst_25 : f32 to vector<22x1xf32>
    %72 = vector.extract_strided_slice %70 {offsets = [0, 1], sizes = [22, 15], strides = [1, 1]} : vector<22x16xf32> to vector<22x15xf32>
    %73 = tpu.concatenate %72, %71 in 1 : vector<22x15xf32>, vector<22x1xf32> -> vector<22x16xf32>
    %74 = arith.minimumf %70, %73 : vector<22x16xf32>
    %75 = vector.extract_strided_slice %70 {offsets = [0, 0], sizes = [22, 15], strides = [1, 1]} : vector<22x16xf32> to vector<22x15xf32>
    %76 = tpu.concatenate %71, %75 in 1 : vector<22x1xf32>, vector<22x15xf32> -> vector<22x16xf32>
    %77 = arith.minimumf %74, %76 : vector<22x16xf32>
    %78 = vector.extract_strided_slice %65 {offsets = [1, 0], sizes = [22, 16], strides = [1, 1]} : vector<24x16xf32> to vector<22x16xf32>
    %79 = arith.subf %78, %77 : vector<22x16xf32>
    %cst_26 = arith.constant -1.000000e+30 : f32
    %80 = vector.shape_cast %56 : vector<22x1xi1> to vector<22x1xi1>
    %81 = vector.broadcast %80 : vector<22x1xi1> to vector<22x16xi1>
    %82 = vector.broadcast %cst_26 : f32 to vector<22x16xf32>
    %83 = arith.select %81, %79, %82 : vector<22x16xi1>, vector<22x16xf32>
    %84 = vector.extract_strided_slice %83 {offsets = [0, 0], sizes = [18, 16], strides = [1, 1]} : vector<22x16xf32> to vector<18x16xf32>
    %85 = vector.extract_strided_slice %83 {offsets = [1, 0], sizes = [18, 16], strides = [1, 1]} : vector<22x16xf32> to vector<18x16xf32>
    %86 = arith.maximumf %84, %85 : vector<18x16xf32>
    %87 = vector.extract_strided_slice %83 {offsets = [2, 0], sizes = [18, 16], strides = [1, 1]} : vector<22x16xf32> to vector<18x16xf32>
    %88 = arith.maximumf %86, %87 : vector<18x16xf32>
    %89 = vector.extract_strided_slice %83 {offsets = [3, 0], sizes = [18, 16], strides = [1, 1]} : vector<22x16xf32> to vector<18x16xf32>
    %90 = arith.maximumf %88, %89 : vector<18x16xf32>
    %91 = vector.extract_strided_slice %83 {offsets = [4, 0], sizes = [18, 16], strides = [1, 1]} : vector<22x16xf32> to vector<18x16xf32>
    %92 = arith.maximumf %90, %91 : vector<18x16xf32>
    %cst_27 = arith.constant -1.000000e+30 : f32
    %93 = vector.broadcast %cst_27 : f32 to vector<18x1xf32>
    %94 = vector.extract_strided_slice %92 {offsets = [0, 1], sizes = [18, 15], strides = [1, 1]} : vector<18x16xf32> to vector<18x15xf32>
    %95 = tpu.concatenate %94, %93 in 1 : vector<18x15xf32>, vector<18x1xf32> -> vector<18x16xf32>
    %96 = arith.maximumf %92, %95 : vector<18x16xf32>
    %97 = vector.extract_strided_slice %92 {offsets = [0, 0], sizes = [18, 15], strides = [1, 1]} : vector<18x16xf32> to vector<18x15xf32>
    %98 = tpu.concatenate %93, %97 in 1 : vector<18x1xf32>, vector<18x15xf32> -> vector<18x16xf32>
    %99 = arith.maximumf %96, %98 : vector<18x16xf32>
    %cst_28 = arith.constant -1.000000e+30 : f32
    %100 = vector.broadcast %cst_28 : f32 to vector<18x2xf32>
    %101 = vector.extract_strided_slice %92 {offsets = [0, 2], sizes = [18, 14], strides = [1, 1]} : vector<18x16xf32> to vector<18x14xf32>
    %102 = tpu.concatenate %101, %100 in 1 : vector<18x14xf32>, vector<18x2xf32> -> vector<18x16xf32>
    %103 = arith.maximumf %99, %102 : vector<18x16xf32>
    %104 = vector.extract_strided_slice %92 {offsets = [0, 0], sizes = [18, 14], strides = [1, 1]} : vector<18x16xf32> to vector<18x14xf32>
    %105 = tpu.concatenate %100, %104 in 1 : vector<18x2xf32>, vector<18x14xf32> -> vector<18x16xf32>
    %106 = arith.maximumf %103, %105 : vector<18x16xf32>
    %107 = vector.extract_strided_slice %13 {offsets = [0, 0, 0], sizes = [1, 24, 16], strides = [1, 1, 1]} : vector<4x24x16xf32> to vector<1x24x16xf32>
    %108 = vector.shape_cast %107 : vector<1x24x16xf32> to vector<24x16xf32>
    %cst_29 = arith.constant 1.000000e+30 : f32
    %109 = vector.shape_cast %55 : vector<24x1xi1> to vector<24x1xi1>
    %110 = vector.broadcast %109 : vector<24x1xi1> to vector<24x16xi1>
    %111 = vector.broadcast %cst_29 : f32 to vector<24x16xf32>
    %112 = arith.select %110, %108, %111 : vector<24x16xi1>, vector<24x16xf32>
    %113 = vector.extract_strided_slice %112 {offsets = [0, 0], sizes = [22, 16], strides = [1, 1]} : vector<24x16xf32> to vector<22x16xf32>
    %114 = vector.extract_strided_slice %112 {offsets = [1, 0], sizes = [22, 16], strides = [1, 1]} : vector<24x16xf32> to vector<22x16xf32>
    %115 = arith.minimumf %113, %114 : vector<22x16xf32>
    %116 = vector.extract_strided_slice %112 {offsets = [2, 0], sizes = [22, 16], strides = [1, 1]} : vector<24x16xf32> to vector<22x16xf32>
    %117 = arith.minimumf %115, %116 : vector<22x16xf32>
    %cst_30 = arith.constant 1.000000e+30 : f32
    %118 = vector.broadcast %cst_30 : f32 to vector<22x1xf32>
    %119 = vector.extract_strided_slice %117 {offsets = [0, 1], sizes = [22, 15], strides = [1, 1]} : vector<22x16xf32> to vector<22x15xf32>
    %120 = tpu.concatenate %119, %118 in 1 : vector<22x15xf32>, vector<22x1xf32> -> vector<22x16xf32>
    %121 = arith.minimumf %117, %120 : vector<22x16xf32>
    %122 = vector.extract_strided_slice %117 {offsets = [0, 0], sizes = [22, 15], strides = [1, 1]} : vector<22x16xf32> to vector<22x15xf32>
    %123 = tpu.concatenate %118, %122 in 1 : vector<22x1xf32>, vector<22x15xf32> -> vector<22x16xf32>
    %124 = arith.minimumf %121, %123 : vector<22x16xf32>
    %125 = vector.extract_strided_slice %112 {offsets = [1, 0], sizes = [22, 16], strides = [1, 1]} : vector<24x16xf32> to vector<22x16xf32>
    %126 = arith.subf %125, %124 : vector<22x16xf32>
    %cst_31 = arith.constant -1.000000e+30 : f32
    %127 = vector.shape_cast %56 : vector<22x1xi1> to vector<22x1xi1>
    %128 = vector.broadcast %127 : vector<22x1xi1> to vector<22x16xi1>
    %129 = vector.broadcast %cst_31 : f32 to vector<22x16xf32>
    %130 = arith.select %128, %126, %129 : vector<22x16xi1>, vector<22x16xf32>
    %131 = vector.extract_strided_slice %130 {offsets = [0, 0], sizes = [18, 16], strides = [1, 1]} : vector<22x16xf32> to vector<18x16xf32>
    %132 = vector.extract_strided_slice %130 {offsets = [1, 0], sizes = [18, 16], strides = [1, 1]} : vector<22x16xf32> to vector<18x16xf32>
    %133 = arith.maximumf %131, %132 : vector<18x16xf32>
    %134 = vector.extract_strided_slice %130 {offsets = [2, 0], sizes = [18, 16], strides = [1, 1]} : vector<22x16xf32> to vector<18x16xf32>
    %135 = arith.maximumf %133, %134 : vector<18x16xf32>
    %136 = vector.extract_strided_slice %130 {offsets = [3, 0], sizes = [18, 16], strides = [1, 1]} : vector<22x16xf32> to vector<18x16xf32>
    %137 = arith.maximumf %135, %136 : vector<18x16xf32>
    %138 = vector.extract_strided_slice %130 {offsets = [4, 0], sizes = [18, 16], strides = [1, 1]} : vector<22x16xf32> to vector<18x16xf32>
    %139 = arith.maximumf %137, %138 : vector<18x16xf32>
    %cst_32 = arith.constant -1.000000e+30 : f32
    %140 = vector.broadcast %cst_32 : f32 to vector<18x1xf32>
    %141 = vector.extract_strided_slice %139 {offsets = [0, 1], sizes = [18, 15], strides = [1, 1]} : vector<18x16xf32> to vector<18x15xf32>
    %142 = tpu.concatenate %141, %140 in 1 : vector<18x15xf32>, vector<18x1xf32> -> vector<18x16xf32>
    %143 = arith.maximumf %139, %142 : vector<18x16xf32>
    %144 = vector.extract_strided_slice %139 {offsets = [0, 0], sizes = [18, 15], strides = [1, 1]} : vector<18x16xf32> to vector<18x15xf32>
    %145 = tpu.concatenate %140, %144 in 1 : vector<18x1xf32>, vector<18x15xf32> -> vector<18x16xf32>
    %146 = arith.maximumf %143, %145 : vector<18x16xf32>
    %cst_33 = arith.constant -1.000000e+30 : f32
    %147 = vector.broadcast %cst_33 : f32 to vector<18x2xf32>
    %148 = vector.extract_strided_slice %139 {offsets = [0, 2], sizes = [18, 14], strides = [1, 1]} : vector<18x16xf32> to vector<18x14xf32>
    %149 = tpu.concatenate %148, %147 in 1 : vector<18x14xf32>, vector<18x2xf32> -> vector<18x16xf32>
    %150 = arith.maximumf %146, %149 : vector<18x16xf32>
    %151 = vector.extract_strided_slice %139 {offsets = [0, 0], sizes = [18, 14], strides = [1, 1]} : vector<18x16xf32> to vector<18x14xf32>
    %152 = tpu.concatenate %147, %151 in 1 : vector<18x2xf32>, vector<18x14xf32> -> vector<18x16xf32>
    %153 = arith.maximumf %150, %152 : vector<18x16xf32>
    %154 = vector.extract_strided_slice %83 {offsets = [7, 0], sizes = [8, 16], strides = [1, 1]} : vector<22x16xf32> to vector<8x16xf32>
    %155 = vector.extract_strided_slice %130 {offsets = [7, 0], sizes = [8, 16], strides = [1, 1]} : vector<22x16xf32> to vector<8x16xf32>
    %156 = vector.extract_strided_slice %106 {offsets = [5, 0], sizes = [8, 16], strides = [1, 1]} : vector<18x16xf32> to vector<8x16xf32>
    %157 = vector.extract_strided_slice %153 {offsets = [5, 0], sizes = [8, 16], strides = [1, 1]} : vector<18x16xf32> to vector<8x16xf32>
    %158 = arith.mulf %154, %157 : vector<8x16xf32>
    %cst_34 = arith.constant dense<0.000000e+00> : vector<16xf32>
    %159 = vector.multi_reduction <add>, %158, %cst_34 [0] : vector<8x16xf32> to vector<16xf32>
    %160 = vector.shape_cast %159 : vector<16xf32> to vector<1x16xf32>
    %cst_35 = arith.constant dense<0.000000e+00> : vector<16xf32>
    %161 = vector.multi_reduction <add>, %154, %cst_35 [0] : vector<8x16xf32> to vector<16xf32>
    %162 = vector.shape_cast %161 : vector<16xf32> to vector<1x16xf32>
    %163 = arith.mulf %156, %155 : vector<8x16xf32>
    %cst_36 = arith.constant dense<0.000000e+00> : vector<16xf32>
    %164 = vector.multi_reduction <add>, %163, %cst_36 [0] : vector<8x16xf32> to vector<16xf32>
    %165 = vector.shape_cast %164 : vector<16xf32> to vector<1x16xf32>
    %cst_37 = arith.constant dense<0.000000e+00> : vector<16xf32>
    %166 = vector.multi_reduction <add>, %155, %cst_37 [0] : vector<8x16xf32> to vector<16xf32>
    %167 = vector.shape_cast %166 : vector<16xf32> to vector<1x16xf32>
    %168 = tpu.concatenate %160, %162, %165, %167 in 0 : vector<1x16xf32>, vector<1x16xf32>, vector<1x16xf32>, vector<1x16xf32> -> vector<4x16xf32>
    %c0_38 = arith.constant 0 : index
    %c0_39 = arith.constant 0 : index
    %c0_40 = arith.constant 0 : index
    %c0_41 = arith.constant 0 : index
    %c0_42 = arith.constant 0 : index
    %169 = vector.load %arg8[%c0_38, %c0_39, %c0_40, %c0_41, %c0_42] : memref<1x1x4x4x16xf32, #tpu.memory_space<vmem>>, vector<1x1x1x4x16xf32>
    %170 = vector.shape_cast %169 : vector<1x1x1x4x16xf32> to vector<4x16xf32>
    %171 = vector.shape_cast %168 : vector<4x16xf32> to vector<1x1x1x4x16xf32>
    tpu.vector_store %arg8[%c0_38, %c0_39, %c0_40, %c0_41, %c0_42], %171 {strides = array<i32>} : memref<1x1x4x4x16xf32, #tpu.memory_space<vmem>>, vector<1x1x1x4x16xf32>,
    %172 = vector.extract_strided_slice %6 {offsets = [1, 0, 0], sizes = [1, 24, 16], strides = [1, 1, 1]} : vector<4x24x16xf32> to vector<1x24x16xf32>
    %173 = vector.shape_cast %172 : vector<1x24x16xf32> to vector<24x16xf32>
    %174 = arith.subf %173, %24 : vector<24x16xf32>
    %175 = math.exp %174 : vector<24x16xf32>
    %176 = arith.mulf %175, %45 : vector<24x16xf32>
    %cst_43 = arith.constant 1.000000e+30 : f32
    %177 = vector.shape_cast %55 : vector<24x1xi1> to vector<24x1xi1>
    %178 = vector.broadcast %177 : vector<24x1xi1> to vector<24x16xi1>
    %179 = vector.broadcast %cst_43 : f32 to vector<24x16xf32>
    %180 = arith.select %178, %176, %179 : vector<24x16xi1>, vector<24x16xf32>
    %181 = vector.extract_strided_slice %180 {offsets = [0, 0], sizes = [22, 16], strides = [1, 1]} : vector<24x16xf32> to vector<22x16xf32>
    %182 = vector.extract_strided_slice %180 {offsets = [1, 0], sizes = [22, 16], strides = [1, 1]} : vector<24x16xf32> to vector<22x16xf32>
    %183 = arith.minimumf %181, %182 : vector<22x16xf32>
    %184 = vector.extract_strided_slice %180 {offsets = [2, 0], sizes = [22, 16], strides = [1, 1]} : vector<24x16xf32> to vector<22x16xf32>
    %185 = arith.minimumf %183, %184 : vector<22x16xf32>
    %cst_44 = arith.constant 1.000000e+30 : f32
    %186 = vector.broadcast %cst_44 : f32 to vector<22x1xf32>
    %187 = vector.extract_strided_slice %185 {offsets = [0, 1], sizes = [22, 15], strides = [1, 1]} : vector<22x16xf32> to vector<22x15xf32>
    %188 = tpu.concatenate %187, %186 in 1 : vector<22x15xf32>, vector<22x1xf32> -> vector<22x16xf32>
    %189 = arith.minimumf %185, %188 : vector<22x16xf32>
    %190 = vector.extract_strided_slice %185 {offsets = [0, 0], sizes = [22, 15], strides = [1, 1]} : vector<22x16xf32> to vector<22x15xf32>
    %191 = tpu.concatenate %186, %190 in 1 : vector<22x1xf32>, vector<22x15xf32> -> vector<22x16xf32>
    %192 = arith.minimumf %189, %191 : vector<22x16xf32>
    %193 = vector.extract_strided_slice %180 {offsets = [1, 0], sizes = [22, 16], strides = [1, 1]} : vector<24x16xf32> to vector<22x16xf32>
    %194 = arith.subf %193, %192 : vector<22x16xf32>
    %cst_45 = arith.constant -1.000000e+30 : f32
    %195 = vector.shape_cast %56 : vector<22x1xi1> to vector<22x1xi1>
    %196 = vector.broadcast %195 : vector<22x1xi1> to vector<22x16xi1>
    %197 = vector.broadcast %cst_45 : f32 to vector<22x16xf32>
    %198 = arith.select %196, %194, %197 : vector<22x16xi1>, vector<22x16xf32>
    %199 = vector.extract_strided_slice %198 {offsets = [0, 0], sizes = [18, 16], strides = [1, 1]} : vector<22x16xf32> to vector<18x16xf32>
    %200 = vector.extract_strided_slice %198 {offsets = [1, 0], sizes = [18, 16], strides = [1, 1]} : vector<22x16xf32> to vector<18x16xf32>
    %201 = arith.maximumf %199, %200 : vector<18x16xf32>
    %202 = vector.extract_strided_slice %198 {offsets = [2, 0], sizes = [18, 16], strides = [1, 1]} : vector<22x16xf32> to vector<18x16xf32>
    %203 = arith.maximumf %201, %202 : vector<18x16xf32>
    %204 = vector.extract_strided_slice %198 {offsets = [3, 0], sizes = [18, 16], strides = [1, 1]} : vector<22x16xf32> to vector<18x16xf32>
    %205 = arith.maximumf %203, %204 : vector<18x16xf32>
    %206 = vector.extract_strided_slice %198 {offsets = [4, 0], sizes = [18, 16], strides = [1, 1]} : vector<22x16xf32> to vector<18x16xf32>
    %207 = arith.maximumf %205, %206 : vector<18x16xf32>
    %cst_46 = arith.constant -1.000000e+30 : f32
    %208 = vector.broadcast %cst_46 : f32 to vector<18x1xf32>
    %209 = vector.extract_strided_slice %207 {offsets = [0, 1], sizes = [18, 15], strides = [1, 1]} : vector<18x16xf32> to vector<18x15xf32>
    %210 = tpu.concatenate %209, %208 in 1 : vector<18x15xf32>, vector<18x1xf32> -> vector<18x16xf32>
    %211 = arith.maximumf %207, %210 : vector<18x16xf32>
    %212 = vector.extract_strided_slice %207 {offsets = [0, 0], sizes = [18, 15], strides = [1, 1]} : vector<18x16xf32> to vector<18x15xf32>
    %213 = tpu.concatenate %208, %212 in 1 : vector<18x1xf32>, vector<18x15xf32> -> vector<18x16xf32>
    %214 = arith.maximumf %211, %213 : vector<18x16xf32>
    %cst_47 = arith.constant -1.000000e+30 : f32
    %215 = vector.broadcast %cst_47 : f32 to vector<18x2xf32>
    %216 = vector.extract_strided_slice %207 {offsets = [0, 2], sizes = [18, 14], strides = [1, 1]} : vector<18x16xf32> to vector<18x14xf32>
    %217 = tpu.concatenate %216, %215 in 1 : vector<18x14xf32>, vector<18x2xf32> -> vector<18x16xf32>
    %218 = arith.maximumf %214, %217 : vector<18x16xf32>
    %219 = vector.extract_strided_slice %207 {offsets = [0, 0], sizes = [18, 14], strides = [1, 1]} : vector<18x16xf32> to vector<18x14xf32>
    %220 = tpu.concatenate %215, %219 in 1 : vector<18x2xf32>, vector<18x14xf32> -> vector<18x16xf32>
    %221 = arith.maximumf %218, %220 : vector<18x16xf32>
    %222 = vector.extract_strided_slice %13 {offsets = [1, 0, 0], sizes = [1, 24, 16], strides = [1, 1, 1]} : vector<4x24x16xf32> to vector<1x24x16xf32>
    %223 = vector.shape_cast %222 : vector<1x24x16xf32> to vector<24x16xf32>
    %cst_48 = arith.constant 1.000000e+30 : f32
    %224 = vector.shape_cast %55 : vector<24x1xi1> to vector<24x1xi1>
    %225 = vector.broadcast %224 : vector<24x1xi1> to vector<24x16xi1>
    %226 = vector.broadcast %cst_48 : f32 to vector<24x16xf32>
    %227 = arith.select %225, %223, %226 : vector<24x16xi1>, vector<24x16xf32>
    %228 = vector.extract_strided_slice %227 {offsets = [0, 0], sizes = [22, 16], strides = [1, 1]} : vector<24x16xf32> to vector<22x16xf32>
    %229 = vector.extract_strided_slice %227 {offsets = [1, 0], sizes = [22, 16], strides = [1, 1]} : vector<24x16xf32> to vector<22x16xf32>
    %230 = arith.minimumf %228, %229 : vector<22x16xf32>
    %231 = vector.extract_strided_slice %227 {offsets = [2, 0], sizes = [22, 16], strides = [1, 1]} : vector<24x16xf32> to vector<22x16xf32>
    %232 = arith.minimumf %230, %231 : vector<22x16xf32>
    %cst_49 = arith.constant 1.000000e+30 : f32
    %233 = vector.broadcast %cst_49 : f32 to vector<22x1xf32>
    %234 = vector.extract_strided_slice %232 {offsets = [0, 1], sizes = [22, 15], strides = [1, 1]} : vector<22x16xf32> to vector<22x15xf32>
    %235 = tpu.concatenate %234, %233 in 1 : vector<22x15xf32>, vector<22x1xf32> -> vector<22x16xf32>
    %236 = arith.minimumf %232, %235 : vector<22x16xf32>
    %237 = vector.extract_strided_slice %232 {offsets = [0, 0], sizes = [22, 15], strides = [1, 1]} : vector<22x16xf32> to vector<22x15xf32>
    %238 = tpu.concatenate %233, %237 in 1 : vector<22x1xf32>, vector<22x15xf32> -> vector<22x16xf32>
    %239 = arith.minimumf %236, %238 : vector<22x16xf32>
    %240 = vector.extract_strided_slice %227 {offsets = [1, 0], sizes = [22, 16], strides = [1, 1]} : vector<24x16xf32> to vector<22x16xf32>
    %241 = arith.subf %240, %239 : vector<22x16xf32>
    %cst_50 = arith.constant -1.000000e+30 : f32
    %242 = vector.shape_cast %56 : vector<22x1xi1> to vector<22x1xi1>
    %243 = vector.broadcast %242 : vector<22x1xi1> to vector<22x16xi1>
    %244 = vector.broadcast %cst_50 : f32 to vector<22x16xf32>
    %245 = arith.select %243, %241, %244 : vector<22x16xi1>, vector<22x16xf32>
    %246 = vector.extract_strided_slice %245 {offsets = [0, 0], sizes = [18, 16], strides = [1, 1]} : vector<22x16xf32> to vector<18x16xf32>
    %247 = vector.extract_strided_slice %245 {offsets = [1, 0], sizes = [18, 16], strides = [1, 1]} : vector<22x16xf32> to vector<18x16xf32>
    %248 = arith.maximumf %246, %247 : vector<18x16xf32>
    %249 = vector.extract_strided_slice %245 {offsets = [2, 0], sizes = [18, 16], strides = [1, 1]} : vector<22x16xf32> to vector<18x16xf32>
    %250 = arith.maximumf %248, %249 : vector<18x16xf32>
    %251 = vector.extract_strided_slice %245 {offsets = [3, 0], sizes = [18, 16], strides = [1, 1]} : vector<22x16xf32> to vector<18x16xf32>
    %252 = arith.maximumf %250, %251 : vector<18x16xf32>
    %253 = vector.extract_strided_slice %245 {offsets = [4, 0], sizes = [18, 16], strides = [1, 1]} : vector<22x16xf32> to vector<18x16xf32>
    %254 = arith.maximumf %252, %253 : vector<18x16xf32>
    %cst_51 = arith.constant -1.000000e+30 : f32
    %255 = vector.broadcast %cst_51 : f32 to vector<18x1xf32>
    %256 = vector.extract_strided_slice %254 {offsets = [0, 1], sizes = [18, 15], strides = [1, 1]} : vector<18x16xf32> to vector<18x15xf32>
    %257 = tpu.concatenate %256, %255 in 1 : vector<18x15xf32>, vector<18x1xf32> -> vector<18x16xf32>
    %258 = arith.maximumf %254, %257 : vector<18x16xf32>
    %259 = vector.extract_strided_slice %254 {offsets = [0, 0], sizes = [18, 15], strides = [1, 1]} : vector<18x16xf32> to vector<18x15xf32>
    %260 = tpu.concatenate %255, %259 in 1 : vector<18x1xf32>, vector<18x15xf32> -> vector<18x16xf32>
    %261 = arith.maximumf %258, %260 : vector<18x16xf32>
    %cst_52 = arith.constant -1.000000e+30 : f32
    %262 = vector.broadcast %cst_52 : f32 to vector<18x2xf32>
    %263 = vector.extract_strided_slice %254 {offsets = [0, 2], sizes = [18, 14], strides = [1, 1]} : vector<18x16xf32> to vector<18x14xf32>
    %264 = tpu.concatenate %263, %262 in 1 : vector<18x14xf32>, vector<18x2xf32> -> vector<18x16xf32>
    %265 = arith.maximumf %261, %264 : vector<18x16xf32>
    %266 = vector.extract_strided_slice %254 {offsets = [0, 0], sizes = [18, 14], strides = [1, 1]} : vector<18x16xf32> to vector<18x14xf32>
    %267 = tpu.concatenate %262, %266 in 1 : vector<18x2xf32>, vector<18x14xf32> -> vector<18x16xf32>
    %268 = arith.maximumf %265, %267 : vector<18x16xf32>
    %269 = vector.extract_strided_slice %198 {offsets = [7, 0], sizes = [8, 16], strides = [1, 1]} : vector<22x16xf32> to vector<8x16xf32>
    %270 = vector.extract_strided_slice %245 {offsets = [7, 0], sizes = [8, 16], strides = [1, 1]} : vector<22x16xf32> to vector<8x16xf32>
    %271 = vector.extract_strided_slice %221 {offsets = [5, 0], sizes = [8, 16], strides = [1, 1]} : vector<18x16xf32> to vector<8x16xf32>
    %272 = vector.extract_strided_slice %268 {offsets = [5, 0], sizes = [8, 16], strides = [1, 1]} : vector<18x16xf32> to vector<8x16xf32>
    %273 = arith.mulf %269, %272 : vector<8x16xf32>
    %cst_53 = arith.constant dense<0.000000e+00> : vector<16xf32>
    %274 = vector.multi_reduction <add>, %273, %cst_53 [0] : vector<8x16xf32> to vector<16xf32>
    %275 = vector.shape_cast %274 : vector<16xf32> to vector<1x16xf32>
    %cst_54 = arith.constant dense<0.000000e+00> : vector<16xf32>
    %276 = vector.multi_reduction <add>, %269, %cst_54 [0] : vector<8x16xf32> to vector<16xf32>
    %277 = vector.shape_cast %276 : vector<16xf32> to vector<1x16xf32>
    %278 = arith.mulf %271, %270 : vector<8x16xf32>
    %cst_55 = arith.constant dense<0.000000e+00> : vector<16xf32>
    %279 = vector.multi_reduction <add>, %278, %cst_55 [0] : vector<8x16xf32> to vector<16xf32>
    %280 = vector.shape_cast %279 : vector<16xf32> to vector<1x16xf32>
    %cst_56 = arith.constant dense<0.000000e+00> : vector<16xf32>
    %281 = vector.multi_reduction <add>, %270, %cst_56 [0] : vector<8x16xf32> to vector<16xf32>
    %282 = vector.shape_cast %281 : vector<16xf32> to vector<1x16xf32>
    %283 = tpu.concatenate %275, %277, %280, %282 in 0 : vector<1x16xf32>, vector<1x16xf32>, vector<1x16xf32>, vector<1x16xf32> -> vector<4x16xf32>
    %c0_57 = arith.constant 0 : index
    %c0_58 = arith.constant 0 : index
    %c1 = arith.constant 1 : index
    %c0_59 = arith.constant 0 : index
    %c0_60 = arith.constant 0 : index
    %284 = vector.load %arg8[%c0_57, %c0_58, %c1, %c0_59, %c0_60] : memref<1x1x4x4x16xf32, #tpu.memory_space<vmem>>, vector<1x1x1x4x16xf32>
    %285 = vector.shape_cast %284 : vector<1x1x1x4x16xf32> to vector<4x16xf32>
    %286 = vector.shape_cast %283 : vector<4x16xf32> to vector<1x1x1x4x16xf32>
    tpu.vector_store %arg8[%c0_57, %c0_58, %c1, %c0_59, %c0_60], %286 {strides = array<i32>} : memref<1x1x4x4x16xf32, #tpu.memory_space<vmem>>, vector<1x1x1x4x16xf32>,
    %287 = vector.extract_strided_slice %6 {offsets = [2, 0, 0], sizes = [1, 24, 16], strides = [1, 1, 1]} : vector<4x24x16xf32> to vector<1x24x16xf32>
    %288 = vector.shape_cast %287 : vector<1x24x16xf32> to vector<24x16xf32>
    %289 = arith.subf %288, %24 : vector<24x16xf32>
    %290 = math.exp %289 : vector<24x16xf32>
    %291 = arith.mulf %290, %45 : vector<24x16xf32>
    %cst_61 = arith.constant 1.000000e+30 : f32
    %292 = vector.shape_cast %55 : vector<24x1xi1> to vector<24x1xi1>
    %293 = vector.broadcast %292 : vector<24x1xi1> to vector<24x16xi1>
    %294 = vector.broadcast %cst_61 : f32 to vector<24x16xf32>
    %295 = arith.select %293, %291, %294 : vector<24x16xi1>, vector<24x16xf32>
    %296 = vector.extract_strided_slice %295 {offsets = [0, 0], sizes = [22, 16], strides = [1, 1]} : vector<24x16xf32> to vector<22x16xf32>
    %297 = vector.extract_strided_slice %295 {offsets = [1, 0], sizes = [22, 16], strides = [1, 1]} : vector<24x16xf32> to vector<22x16xf32>
    %298 = arith.minimumf %296, %297 : vector<22x16xf32>
    %299 = vector.extract_strided_slice %295 {offsets = [2, 0], sizes = [22, 16], strides = [1, 1]} : vector<24x16xf32> to vector<22x16xf32>
    %300 = arith.minimumf %298, %299 : vector<22x16xf32>
    %cst_62 = arith.constant 1.000000e+30 : f32
    %301 = vector.broadcast %cst_62 : f32 to vector<22x1xf32>
    %302 = vector.extract_strided_slice %300 {offsets = [0, 1], sizes = [22, 15], strides = [1, 1]} : vector<22x16xf32> to vector<22x15xf32>
    %303 = tpu.concatenate %302, %301 in 1 : vector<22x15xf32>, vector<22x1xf32> -> vector<22x16xf32>
    %304 = arith.minimumf %300, %303 : vector<22x16xf32>
    %305 = vector.extract_strided_slice %300 {offsets = [0, 0], sizes = [22, 15], strides = [1, 1]} : vector<22x16xf32> to vector<22x15xf32>
    %306 = tpu.concatenate %301, %305 in 1 : vector<22x1xf32>, vector<22x15xf32> -> vector<22x16xf32>
    %307 = arith.minimumf %304, %306 : vector<22x16xf32>
    %308 = vector.extract_strided_slice %295 {offsets = [1, 0], sizes = [22, 16], strides = [1, 1]} : vector<24x16xf32> to vector<22x16xf32>
    %309 = arith.subf %308, %307 : vector<22x16xf32>
    %cst_63 = arith.constant -1.000000e+30 : f32
    %310 = vector.shape_cast %56 : vector<22x1xi1> to vector<22x1xi1>
    %311 = vector.broadcast %310 : vector<22x1xi1> to vector<22x16xi1>
    %312 = vector.broadcast %cst_63 : f32 to vector<22x16xf32>
    %313 = arith.select %311, %309, %312 : vector<22x16xi1>, vector<22x16xf32>
    %314 = vector.extract_strided_slice %313 {offsets = [0, 0], sizes = [18, 16], strides = [1, 1]} : vector<22x16xf32> to vector<18x16xf32>
    %315 = vector.extract_strided_slice %313 {offsets = [1, 0], sizes = [18, 16], strides = [1, 1]} : vector<22x16xf32> to vector<18x16xf32>
    %316 = arith.maximumf %314, %315 : vector<18x16xf32>
    %317 = vector.extract_strided_slice %313 {offsets = [2, 0], sizes = [18, 16], strides = [1, 1]} : vector<22x16xf32> to vector<18x16xf32>
    %318 = arith.maximumf %316, %317 : vector<18x16xf32>
    %319 = vector.extract_strided_slice %313 {offsets = [3, 0], sizes = [18, 16], strides = [1, 1]} : vector<22x16xf32> to vector<18x16xf32>
    %320 = arith.maximumf %318, %319 : vector<18x16xf32>
    %321 = vector.extract_strided_slice %313 {offsets = [4, 0], sizes = [18, 16], strides = [1, 1]} : vector<22x16xf32> to vector<18x16xf32>
    %322 = arith.maximumf %320, %321 : vector<18x16xf32>
    %cst_64 = arith.constant -1.000000e+30 : f32
    %323 = vector.broadcast %cst_64 : f32 to vector<18x1xf32>
    %324 = vector.extract_strided_slice %322 {offsets = [0, 1], sizes = [18, 15], strides = [1, 1]} : vector<18x16xf32> to vector<18x15xf32>
    %325 = tpu.concatenate %324, %323 in 1 : vector<18x15xf32>, vector<18x1xf32> -> vector<18x16xf32>
    %326 = arith.maximumf %322, %325 : vector<18x16xf32>
    %327 = vector.extract_strided_slice %322 {offsets = [0, 0], sizes = [18, 15], strides = [1, 1]} : vector<18x16xf32> to vector<18x15xf32>
    %328 = tpu.concatenate %323, %327 in 1 : vector<18x1xf32>, vector<18x15xf32> -> vector<18x16xf32>
    %329 = arith.maximumf %326, %328 : vector<18x16xf32>
    %cst_65 = arith.constant -1.000000e+30 : f32
    %330 = vector.broadcast %cst_65 : f32 to vector<18x2xf32>
    %331 = vector.extract_strided_slice %322 {offsets = [0, 2], sizes = [18, 14], strides = [1, 1]} : vector<18x16xf32> to vector<18x14xf32>
    %332 = tpu.concatenate %331, %330 in 1 : vector<18x14xf32>, vector<18x2xf32> -> vector<18x16xf32>
    %333 = arith.maximumf %329, %332 : vector<18x16xf32>
    %334 = vector.extract_strided_slice %322 {offsets = [0, 0], sizes = [18, 14], strides = [1, 1]} : vector<18x16xf32> to vector<18x14xf32>
    %335 = tpu.concatenate %330, %334 in 1 : vector<18x2xf32>, vector<18x14xf32> -> vector<18x16xf32>
    %336 = arith.maximumf %333, %335 : vector<18x16xf32>
    %337 = vector.extract_strided_slice %13 {offsets = [2, 0, 0], sizes = [1, 24, 16], strides = [1, 1, 1]} : vector<4x24x16xf32> to vector<1x24x16xf32>
    %338 = vector.shape_cast %337 : vector<1x24x16xf32> to vector<24x16xf32>
    %cst_66 = arith.constant 1.000000e+30 : f32
    %339 = vector.shape_cast %55 : vector<24x1xi1> to vector<24x1xi1>
    %340 = vector.broadcast %339 : vector<24x1xi1> to vector<24x16xi1>
    %341 = vector.broadcast %cst_66 : f32 to vector<24x16xf32>
    %342 = arith.select %340, %338, %341 : vector<24x16xi1>, vector<24x16xf32>
    %343 = vector.extract_strided_slice %342 {offsets = [0, 0], sizes = [22, 16], strides = [1, 1]} : vector<24x16xf32> to vector<22x16xf32>
    %344 = vector.extract_strided_slice %342 {offsets = [1, 0], sizes = [22, 16], strides = [1, 1]} : vector<24x16xf32> to vector<22x16xf32>
    %345 = arith.minimumf %343, %344 : vector<22x16xf32>
    %346 = vector.extract_strided_slice %342 {offsets = [2, 0], sizes = [22, 16], strides = [1, 1]} : vector<24x16xf32> to vector<22x16xf32>
    %347 = arith.minimumf %345, %346 : vector<22x16xf32>
    %cst_67 = arith.constant 1.000000e+30 : f32
    %348 = vector.broadcast %cst_67 : f32 to vector<22x1xf32>
    %349 = vector.extract_strided_slice %347 {offsets = [0, 1], sizes = [22, 15], strides = [1, 1]} : vector<22x16xf32> to vector<22x15xf32>
    %350 = tpu.concatenate %349, %348 in 1 : vector<22x15xf32>, vector<22x1xf32> -> vector<22x16xf32>
    %351 = arith.minimumf %347, %350 : vector<22x16xf32>
    %352 = vector.extract_strided_slice %347 {offsets = [0, 0], sizes = [22, 15], strides = [1, 1]} : vector<22x16xf32> to vector<22x15xf32>
    %353 = tpu.concatenate %348, %352 in 1 : vector<22x1xf32>, vector<22x15xf32> -> vector<22x16xf32>
    %354 = arith.minimumf %351, %353 : vector<22x16xf32>
    %355 = vector.extract_strided_slice %342 {offsets = [1, 0], sizes = [22, 16], strides = [1, 1]} : vector<24x16xf32> to vector<22x16xf32>
    %356 = arith.subf %355, %354 : vector<22x16xf32>
    %cst_68 = arith.constant -1.000000e+30 : f32
    %357 = vector.shape_cast %56 : vector<22x1xi1> to vector<22x1xi1>
    %358 = vector.broadcast %357 : vector<22x1xi1> to vector<22x16xi1>
    %359 = vector.broadcast %cst_68 : f32 to vector<22x16xf32>
    %360 = arith.select %358, %356, %359 : vector<22x16xi1>, vector<22x16xf32>
    %361 = vector.extract_strided_slice %360 {offsets = [0, 0], sizes = [18, 16], strides = [1, 1]} : vector<22x16xf32> to vector<18x16xf32>
    %362 = vector.extract_strided_slice %360 {offsets = [1, 0], sizes = [18, 16], strides = [1, 1]} : vector<22x16xf32> to vector<18x16xf32>
    %363 = arith.maximumf %361, %362 : vector<18x16xf32>
    %364 = vector.extract_strided_slice %360 {offsets = [2, 0], sizes = [18, 16], strides = [1, 1]} : vector<22x16xf32> to vector<18x16xf32>
    %365 = arith.maximumf %363, %364 : vector<18x16xf32>
    %366 = vector.extract_strided_slice %360 {offsets = [3, 0], sizes = [18, 16], strides = [1, 1]} : vector<22x16xf32> to vector<18x16xf32>
    %367 = arith.maximumf %365, %366 : vector<18x16xf32>
    %368 = vector.extract_strided_slice %360 {offsets = [4, 0], sizes = [18, 16], strides = [1, 1]} : vector<22x16xf32> to vector<18x16xf32>
    %369 = arith.maximumf %367, %368 : vector<18x16xf32>
    %cst_69 = arith.constant -1.000000e+30 : f32
    %370 = vector.broadcast %cst_69 : f32 to vector<18x1xf32>
    %371 = vector.extract_strided_slice %369 {offsets = [0, 1], sizes = [18, 15], strides = [1, 1]} : vector<18x16xf32> to vector<18x15xf32>
    %372 = tpu.concatenate %371, %370 in 1 : vector<18x15xf32>, vector<18x1xf32> -> vector<18x16xf32>
    %373 = arith.maximumf %369, %372 : vector<18x16xf32>
    %374 = vector.extract_strided_slice %369 {offsets = [0, 0], sizes = [18, 15], strides = [1, 1]} : vector<18x16xf32> to vector<18x15xf32>
    %375 = tpu.concatenate %370, %374 in 1 : vector<18x1xf32>, vector<18x15xf32> -> vector<18x16xf32>
    %376 = arith.maximumf %373, %375 : vector<18x16xf32>
    %cst_70 = arith.constant -1.000000e+30 : f32
    %377 = vector.broadcast %cst_70 : f32 to vector<18x2xf32>
    %378 = vector.extract_strided_slice %369 {offsets = [0, 2], sizes = [18, 14], strides = [1, 1]} : vector<18x16xf32> to vector<18x14xf32>
    %379 = tpu.concatenate %378, %377 in 1 : vector<18x14xf32>, vector<18x2xf32> -> vector<18x16xf32>
    %380 = arith.maximumf %376, %379 : vector<18x16xf32>
    %381 = vector.extract_strided_slice %369 {offsets = [0, 0], sizes = [18, 14], strides = [1, 1]} : vector<18x16xf32> to vector<18x14xf32>
    %382 = tpu.concatenate %377, %381 in 1 : vector<18x2xf32>, vector<18x14xf32> -> vector<18x16xf32>
    %383 = arith.maximumf %380, %382 : vector<18x16xf32>
    %384 = vector.extract_strided_slice %313 {offsets = [7, 0], sizes = [8, 16], strides = [1, 1]} : vector<22x16xf32> to vector<8x16xf32>
    %385 = vector.extract_strided_slice %360 {offsets = [7, 0], sizes = [8, 16], strides = [1, 1]} : vector<22x16xf32> to vector<8x16xf32>
    %386 = vector.extract_strided_slice %336 {offsets = [5, 0], sizes = [8, 16], strides = [1, 1]} : vector<18x16xf32> to vector<8x16xf32>
    %387 = vector.extract_strided_slice %383 {offsets = [5, 0], sizes = [8, 16], strides = [1, 1]} : vector<18x16xf32> to vector<8x16xf32>
    %388 = arith.mulf %384, %387 : vector<8x16xf32>
    %cst_71 = arith.constant dense<0.000000e+00> : vector<16xf32>
    %389 = vector.multi_reduction <add>, %388, %cst_71 [0] : vector<8x16xf32> to vector<16xf32>
    %390 = vector.shape_cast %389 : vector<16xf32> to vector<1x16xf32>
    %cst_72 = arith.constant dense<0.000000e+00> : vector<16xf32>
    %391 = vector.multi_reduction <add>, %384, %cst_72 [0] : vector<8x16xf32> to vector<16xf32>
    %392 = vector.shape_cast %391 : vector<16xf32> to vector<1x16xf32>
    %393 = arith.mulf %386, %385 : vector<8x16xf32>
    %cst_73 = arith.constant dense<0.000000e+00> : vector<16xf32>
    %394 = vector.multi_reduction <add>, %393, %cst_73 [0] : vector<8x16xf32> to vector<16xf32>
    %395 = vector.shape_cast %394 : vector<16xf32> to vector<1x16xf32>
    %cst_74 = arith.constant dense<0.000000e+00> : vector<16xf32>
    %396 = vector.multi_reduction <add>, %385, %cst_74 [0] : vector<8x16xf32> to vector<16xf32>
    %397 = vector.shape_cast %396 : vector<16xf32> to vector<1x16xf32>
    %398 = tpu.concatenate %390, %392, %395, %397 in 0 : vector<1x16xf32>, vector<1x16xf32>, vector<1x16xf32>, vector<1x16xf32> -> vector<4x16xf32>
    %c0_75 = arith.constant 0 : index
    %c0_76 = arith.constant 0 : index
    %c2 = arith.constant 2 : index
    %c0_77 = arith.constant 0 : index
    %c0_78 = arith.constant 0 : index
    %399 = vector.load %arg8[%c0_75, %c0_76, %c2, %c0_77, %c0_78] : memref<1x1x4x4x16xf32, #tpu.memory_space<vmem>>, vector<1x1x1x4x16xf32>
    %400 = vector.shape_cast %399 : vector<1x1x1x4x16xf32> to vector<4x16xf32>
    %401 = vector.shape_cast %398 : vector<4x16xf32> to vector<1x1x1x4x16xf32>
    tpu.vector_store %arg8[%c0_75, %c0_76, %c2, %c0_77, %c0_78], %401 {strides = array<i32>} : memref<1x1x4x4x16xf32, #tpu.memory_space<vmem>>, vector<1x1x1x4x16xf32>,
    %402 = vector.extract_strided_slice %6 {offsets = [3, 0, 0], sizes = [1, 24, 16], strides = [1, 1, 1]} : vector<4x24x16xf32> to vector<1x24x16xf32>
    %403 = vector.shape_cast %402 : vector<1x24x16xf32> to vector<24x16xf32>
    %404 = arith.subf %403, %24 : vector<24x16xf32>
    %405 = math.exp %404 : vector<24x16xf32>
    %406 = arith.mulf %405, %45 : vector<24x16xf32>
    %cst_79 = arith.constant 1.000000e+30 : f32
    %407 = vector.shape_cast %55 : vector<24x1xi1> to vector<24x1xi1>
    %408 = vector.broadcast %407 : vector<24x1xi1> to vector<24x16xi1>
    %409 = vector.broadcast %cst_79 : f32 to vector<24x16xf32>
    %410 = arith.select %408, %406, %409 : vector<24x16xi1>, vector<24x16xf32>
    %411 = vector.extract_strided_slice %410 {offsets = [0, 0], sizes = [22, 16], strides = [1, 1]} : vector<24x16xf32> to vector<22x16xf32>
    %412 = vector.extract_strided_slice %410 {offsets = [1, 0], sizes = [22, 16], strides = [1, 1]} : vector<24x16xf32> to vector<22x16xf32>
    %413 = arith.minimumf %411, %412 : vector<22x16xf32>
    %414 = vector.extract_strided_slice %410 {offsets = [2, 0], sizes = [22, 16], strides = [1, 1]} : vector<24x16xf32> to vector<22x16xf32>
    %415 = arith.minimumf %413, %414 : vector<22x16xf32>
    %cst_80 = arith.constant 1.000000e+30 : f32
    %416 = vector.broadcast %cst_80 : f32 to vector<22x1xf32>
    %417 = vector.extract_strided_slice %415 {offsets = [0, 1], sizes = [22, 15], strides = [1, 1]} : vector<22x16xf32> to vector<22x15xf32>
    %418 = tpu.concatenate %417, %416 in 1 : vector<22x15xf32>, vector<22x1xf32> -> vector<22x16xf32>
    %419 = arith.minimumf %415, %418 : vector<22x16xf32>
    %420 = vector.extract_strided_slice %415 {offsets = [0, 0], sizes = [22, 15], strides = [1, 1]} : vector<22x16xf32> to vector<22x15xf32>
    %421 = tpu.concatenate %416, %420 in 1 : vector<22x1xf32>, vector<22x15xf32> -> vector<22x16xf32>
    %422 = arith.minimumf %419, %421 : vector<22x16xf32>
    %423 = vector.extract_strided_slice %410 {offsets = [1, 0], sizes = [22, 16], strides = [1, 1]} : vector<24x16xf32> to vector<22x16xf32>
    %424 = arith.subf %423, %422 : vector<22x16xf32>
    %cst_81 = arith.constant -1.000000e+30 : f32
    %425 = vector.shape_cast %56 : vector<22x1xi1> to vector<22x1xi1>
    %426 = vector.broadcast %425 : vector<22x1xi1> to vector<22x16xi1>
    %427 = vector.broadcast %cst_81 : f32 to vector<22x16xf32>
    %428 = arith.select %426, %424, %427 : vector<22x16xi1>, vector<22x16xf32>
    %429 = vector.extract_strided_slice %428 {offsets = [0, 0], sizes = [18, 16], strides = [1, 1]} : vector<22x16xf32> to vector<18x16xf32>
    %430 = vector.extract_strided_slice %428 {offsets = [1, 0], sizes = [18, 16], strides = [1, 1]} : vector<22x16xf32> to vector<18x16xf32>
    %431 = arith.maximumf %429, %430 : vector<18x16xf32>
    %432 = vector.extract_strided_slice %428 {offsets = [2, 0], sizes = [18, 16], strides = [1, 1]} : vector<22x16xf32> to vector<18x16xf32>
    %433 = arith.maximumf %431, %432 : vector<18x16xf32>
    %434 = vector.extract_strided_slice %428 {offsets = [3, 0], sizes = [18, 16], strides = [1, 1]} : vector<22x16xf32> to vector<18x16xf32>
    %435 = arith.maximumf %433, %434 : vector<18x16xf32>
    %436 = vector.extract_strided_slice %428 {offsets = [4, 0], sizes = [18, 16], strides = [1, 1]} : vector<22x16xf32> to vector<18x16xf32>
    %437 = arith.maximumf %435, %436 : vector<18x16xf32>
    %cst_82 = arith.constant -1.000000e+30 : f32
    %438 = vector.broadcast %cst_82 : f32 to vector<18x1xf32>
    %439 = vector.extract_strided_slice %437 {offsets = [0, 1], sizes = [18, 15], strides = [1, 1]} : vector<18x16xf32> to vector<18x15xf32>
    %440 = tpu.concatenate %439, %438 in 1 : vector<18x15xf32>, vector<18x1xf32> -> vector<18x16xf32>
    %441 = arith.maximumf %437, %440 : vector<18x16xf32>
    %442 = vector.extract_strided_slice %437 {offsets = [0, 0], sizes = [18, 15], strides = [1, 1]} : vector<18x16xf32> to vector<18x15xf32>
    %443 = tpu.concatenate %438, %442 in 1 : vector<18x1xf32>, vector<18x15xf32> -> vector<18x16xf32>
    %444 = arith.maximumf %441, %443 : vector<18x16xf32>
    %cst_83 = arith.constant -1.000000e+30 : f32
    %445 = vector.broadcast %cst_83 : f32 to vector<18x2xf32>
    %446 = vector.extract_strided_slice %437 {offsets = [0, 2], sizes = [18, 14], strides = [1, 1]} : vector<18x16xf32> to vector<18x14xf32>
    %447 = tpu.concatenate %446, %445 in 1 : vector<18x14xf32>, vector<18x2xf32> -> vector<18x16xf32>
    %448 = arith.maximumf %444, %447 : vector<18x16xf32>
    %449 = vector.extract_strided_slice %437 {offsets = [0, 0], sizes = [18, 14], strides = [1, 1]} : vector<18x16xf32> to vector<18x14xf32>
    %450 = tpu.concatenate %445, %449 in 1 : vector<18x2xf32>, vector<18x14xf32> -> vector<18x16xf32>
    %451 = arith.maximumf %448, %450 : vector<18x16xf32>
    %452 = vector.extract_strided_slice %13 {offsets = [3, 0, 0], sizes = [1, 24, 16], strides = [1, 1, 1]} : vector<4x24x16xf32> to vector<1x24x16xf32>
    %453 = vector.shape_cast %452 : vector<1x24x16xf32> to vector<24x16xf32>
    %cst_84 = arith.constant 1.000000e+30 : f32
    %454 = vector.shape_cast %55 : vector<24x1xi1> to vector<24x1xi1>
    %455 = vector.broadcast %454 : vector<24x1xi1> to vector<24x16xi1>
    %456 = vector.broadcast %cst_84 : f32 to vector<24x16xf32>
    %457 = arith.select %455, %453, %456 : vector<24x16xi1>, vector<24x16xf32>
    %458 = vector.extract_strided_slice %457 {offsets = [0, 0], sizes = [22, 16], strides = [1, 1]} : vector<24x16xf32> to vector<22x16xf32>
    %459 = vector.extract_strided_slice %457 {offsets = [1, 0], sizes = [22, 16], strides = [1, 1]} : vector<24x16xf32> to vector<22x16xf32>
    %460 = arith.minimumf %458, %459 : vector<22x16xf32>
    %461 = vector.extract_strided_slice %457 {offsets = [2, 0], sizes = [22, 16], strides = [1, 1]} : vector<24x16xf32> to vector<22x16xf32>
    %462 = arith.minimumf %460, %461 : vector<22x16xf32>
    %cst_85 = arith.constant 1.000000e+30 : f32
    %463 = vector.broadcast %cst_85 : f32 to vector<22x1xf32>
    %464 = vector.extract_strided_slice %462 {offsets = [0, 1], sizes = [22, 15], strides = [1, 1]} : vector<22x16xf32> to vector<22x15xf32>
    %465 = tpu.concatenate %464, %463 in 1 : vector<22x15xf32>, vector<22x1xf32> -> vector<22x16xf32>
    %466 = arith.minimumf %462, %465 : vector<22x16xf32>
    %467 = vector.extract_strided_slice %462 {offsets = [0, 0], sizes = [22, 15], strides = [1, 1]} : vector<22x16xf32> to vector<22x15xf32>
    %468 = tpu.concatenate %463, %467 in 1 : vector<22x1xf32>, vector<22x15xf32> -> vector<22x16xf32>
    %469 = arith.minimumf %466, %468 : vector<22x16xf32>
    %470 = vector.extract_strided_slice %457 {offsets = [1, 0], sizes = [22, 16], strides = [1, 1]} : vector<24x16xf32> to vector<22x16xf32>
    %471 = arith.subf %470, %469 : vector<22x16xf32>
    %cst_86 = arith.constant -1.000000e+30 : f32
    %472 = vector.shape_cast %56 : vector<22x1xi1> to vector<22x1xi1>
    %473 = vector.broadcast %472 : vector<22x1xi1> to vector<22x16xi1>
    %474 = vector.broadcast %cst_86 : f32 to vector<22x16xf32>
    %475 = arith.select %473, %471, %474 : vector<22x16xi1>, vector<22x16xf32>
    %476 = vector.extract_strided_slice %475 {offsets = [0, 0], sizes = [18, 16], strides = [1, 1]} : vector<22x16xf32> to vector<18x16xf32>
    %477 = vector.extract_strided_slice %475 {offsets = [1, 0], sizes = [18, 16], strides = [1, 1]} : vector<22x16xf32> to vector<18x16xf32>
    %478 = arith.maximumf %476, %477 : vector<18x16xf32>
    %479 = vector.extract_strided_slice %475 {offsets = [2, 0], sizes = [18, 16], strides = [1, 1]} : vector<22x16xf32> to vector<18x16xf32>
    %480 = arith.maximumf %478, %479 : vector<18x16xf32>
    %481 = vector.extract_strided_slice %475 {offsets = [3, 0], sizes = [18, 16], strides = [1, 1]} : vector<22x16xf32> to vector<18x16xf32>
    %482 = arith.maximumf %480, %481 : vector<18x16xf32>
    %483 = vector.extract_strided_slice %475 {offsets = [4, 0], sizes = [18, 16], strides = [1, 1]} : vector<22x16xf32> to vector<18x16xf32>
    %484 = arith.maximumf %482, %483 : vector<18x16xf32>
    %cst_87 = arith.constant -1.000000e+30 : f32
    %485 = vector.broadcast %cst_87 : f32 to vector<18x1xf32>
    %486 = vector.extract_strided_slice %484 {offsets = [0, 1], sizes = [18, 15], strides = [1, 1]} : vector<18x16xf32> to vector<18x15xf32>
    %487 = tpu.concatenate %486, %485 in 1 : vector<18x15xf32>, vector<18x1xf32> -> vector<18x16xf32>
    %488 = arith.maximumf %484, %487 : vector<18x16xf32>
    %489 = vector.extract_strided_slice %484 {offsets = [0, 0], sizes = [18, 15], strides = [1, 1]} : vector<18x16xf32> to vector<18x15xf32>
    %490 = tpu.concatenate %485, %489 in 1 : vector<18x1xf32>, vector<18x15xf32> -> vector<18x16xf32>
    %491 = arith.maximumf %488, %490 : vector<18x16xf32>
    %cst_88 = arith.constant -1.000000e+30 : f32
    %492 = vector.broadcast %cst_88 : f32 to vector<18x2xf32>
    %493 = vector.extract_strided_slice %484 {offsets = [0, 2], sizes = [18, 14], strides = [1, 1]} : vector<18x16xf32> to vector<18x14xf32>
    %494 = tpu.concatenate %493, %492 in 1 : vector<18x14xf32>, vector<18x2xf32> -> vector<18x16xf32>
    %495 = arith.maximumf %491, %494 : vector<18x16xf32>
    %496 = vector.extract_strided_slice %484 {offsets = [0, 0], sizes = [18, 14], strides = [1, 1]} : vector<18x16xf32> to vector<18x14xf32>
    %497 = tpu.concatenate %492, %496 in 1 : vector<18x2xf32>, vector<18x14xf32> -> vector<18x16xf32>
    %498 = arith.maximumf %495, %497 : vector<18x16xf32>
    %499 = vector.extract_strided_slice %428 {offsets = [7, 0], sizes = [8, 16], strides = [1, 1]} : vector<22x16xf32> to vector<8x16xf32>
    %500 = vector.extract_strided_slice %475 {offsets = [7, 0], sizes = [8, 16], strides = [1, 1]} : vector<22x16xf32> to vector<8x16xf32>
    %501 = vector.extract_strided_slice %451 {offsets = [5, 0], sizes = [8, 16], strides = [1, 1]} : vector<18x16xf32> to vector<8x16xf32>
    %502 = vector.extract_strided_slice %498 {offsets = [5, 0], sizes = [8, 16], strides = [1, 1]} : vector<18x16xf32> to vector<8x16xf32>
    %503 = arith.mulf %499, %502 : vector<8x16xf32>
    %cst_89 = arith.constant dense<0.000000e+00> : vector<16xf32>
    %504 = vector.multi_reduction <add>, %503, %cst_89 [0] : vector<8x16xf32> to vector<16xf32>
    %505 = vector.shape_cast %504 : vector<16xf32> to vector<1x16xf32>
    %cst_90 = arith.constant dense<0.000000e+00> : vector<16xf32>
    %506 = vector.multi_reduction <add>, %499, %cst_90 [0] : vector<8x16xf32> to vector<16xf32>
    %507 = vector.shape_cast %506 : vector<16xf32> to vector<1x16xf32>
    %508 = arith.mulf %501, %500 : vector<8x16xf32>
    %cst_91 = arith.constant dense<0.000000e+00> : vector<16xf32>
    %509 = vector.multi_reduction <add>, %508, %cst_91 [0] : vector<8x16xf32> to vector<16xf32>
    %510 = vector.shape_cast %509 : vector<16xf32> to vector<1x16xf32>
    %cst_92 = arith.constant dense<0.000000e+00> : vector<16xf32>
    %511 = vector.multi_reduction <add>, %500, %cst_92 [0] : vector<8x16xf32> to vector<16xf32>
    %512 = vector.shape_cast %511 : vector<16xf32> to vector<1x16xf32>
    %513 = tpu.concatenate %505, %507, %510, %512 in 0 : vector<1x16xf32>, vector<1x16xf32>, vector<1x16xf32>, vector<1x16xf32> -> vector<4x16xf32>
    %c0_93 = arith.constant 0 : index
    %c0_94 = arith.constant 0 : index
    %c3 = arith.constant 3 : index
    %c0_95 = arith.constant 0 : index
    %c0_96 = arith.constant 0 : index
    %514 = vector.load %arg8[%c0_93, %c0_94, %c3, %c0_95, %c0_96] : memref<1x1x4x4x16xf32, #tpu.memory_space<vmem>>, vector<1x1x1x4x16xf32>
    %515 = vector.shape_cast %514 : vector<1x1x1x4x16xf32> to vector<4x16xf32>
    %516 = vector.shape_cast %513 : vector<4x16xf32> to vector<1x1x1x4x16xf32>
    tpu.vector_store %arg8[%c0_93, %c0_94, %c3, %c0_95, %c0_96], %516 {strides = array<i32>} : memref<1x1x4x4x16xf32, #tpu.memory_space<vmem>>, vector<1x1x1x4x16xf32>,
    return
  }
  func.func @transform_0(%arg0: i32, %arg1: i32) -> (i32, i32, i32, i32) {
    %c0_i32 = arith.constant 0 : i32
    %c0_i32_0 = arith.constant 0 : i32
    %c0_i32_1 = arith.constant 0 : i32
    return %arg0, %c0_i32, %arg1, %c0_i32_0 : i32, i32, i32, i32
  }
  func.func @transform_1(%arg0: i32, %arg1: i32) -> (i32, i32, i32, i32) {
    %c1_i32 = arith.constant 1 : i32
    %0 = arith.muli %arg1, %c1_i32 : i32
    %c1_i32_0 = arith.constant 1 : i32
    %1 = arith.subi %0, %c1_i32_0 : i32
    %c0_i32 = arith.constant 0 : i32
    %2 = arith.maxsi %1, %c0_i32 : i32
    %c0_i32_1 = arith.constant 0 : i32
    %c0_i32_2 = arith.constant 0 : i32
    %c0_i32_3 = arith.constant 0 : i32
    return %arg0, %c0_i32_1, %2, %c0_i32_2 : i32, i32, i32, i32
  }
  func.func @transform_2(%arg0: i32, %arg1: i32) -> (i32, i32, i32, i32) {
    %c1_i32 = arith.constant 1 : i32
    %0 = arith.addi %arg1, %c1_i32 : i32
    %c1_i32_0 = arith.constant 1 : i32
    %1 = arith.muli %0, %c1_i32_0 : i32
    %c1_i32_1 = arith.constant 1 : i32
    %2 = arith.minsi %1, %c1_i32_1 : i32
    %c0_i32 = arith.constant 0 : i32
    %c0_i32_2 = arith.constant 0 : i32
    %c0_i32_3 = arith.constant 0 : i32
    return %arg0, %c0_i32, %2, %c0_i32_2 : i32, i32, i32, i32
  }
  func.func @transform_3(%arg0: i32, %arg1: i32) -> (i32, i32, i32, i32) {
    %c0_i32 = arith.constant 0 : i32
    %c0_i32_0 = arith.constant 0 : i32
    %c0_i32_1 = arith.constant 0 : i32
    return %arg0, %c0_i32, %arg1, %c0_i32_0 : i32, i32, i32, i32
  }
  func.func @transform_4(%arg0: i32, %arg1: i32) -> (i32, i32, i32, i32) {
    %c1_i32 = arith.constant 1 : i32
    %0 = arith.muli %arg1, %c1_i32 : i32
    %c1_i32_0 = arith.constant 1 : i32
    %1 = arith.subi %0, %c1_i32_0 : i32
    %c0_i32 = arith.constant 0 : i32
    %2 = arith.maxsi %1, %c0_i32 : i32
    %c0_i32_1 = arith.constant 0 : i32
    %c0_i32_2 = arith.constant 0 : i32
    %c0_i32_3 = arith.constant 0 : i32
    return %arg0, %c0_i32_1, %2, %c0_i32_2 : i32, i32, i32, i32
  }
  func.func @transform_5(%arg0: i32, %arg1: i32) -> (i32, i32, i32, i32) {
    %c1_i32 = arith.constant 1 : i32
    %0 = arith.addi %arg1, %c1_i32 : i32
    %c1_i32_0 = arith.constant 1 : i32
    %1 = arith.muli %0, %c1_i32_0 : i32
    %c1_i32_1 = arith.constant 1 : i32
    %2 = arith.minsi %1, %c1_i32_1 : i32
    %c0_i32 = arith.constant 0 : i32
    %c0_i32_2 = arith.constant 0 : i32
    %c0_i32_3 = arith.constant 0 : i32
    return %arg0, %c0_i32, %2, %c0_i32_2 : i32, i32, i32, i32
  }
  func.func @transform_6(%arg0: i32, %arg1: i32) -> (i32, i32, i32, i32, i32) {
    %c0_i32 = arith.constant 0 : i32
    %c0_i32_0 = arith.constant 0 : i32
    %c0_i32_1 = arith.constant 0 : i32
    %c0_i32_2 = arith.constant 0 : i32
    return %arg0, %arg1, %c0_i32, %c0_i32_0, %c0_i32_1 : i32, i32, i32, i32, i32
  }
}

</mosaic_0001>

<llo_original>
// kernel: tpu_custom_call.1
$region0: #{tpu_custom_call.1}
  #allocation0 [shape = 'u32[]', space=smem, size = 0x4, offset = 0x4, fixed_abs, tag = 'smem constant byte address 0x4 - core index']
  #allocation1 [shape = 'u32[144,128]{1,0:T(1,128)}', space=vmem, size = 0x12000, scoped, tag = 'internal scratch']
  %s0 = inlined_call_operand.hbm [shape: f32[2,4,16,16], index: 0, kind: input, shape index: {}]
  %s1 = inlined_call_operand.hbm [shape: f32[2,4,16,16], index: 1, kind: input, shape index: {}]
  %s2 = inlined_call_operand.hbm [shape: f32[2,4,16,16], index: 2, kind: input, shape index: {}]
  %s3 = inlined_call_operand.hbm [shape: f32[2,4,16,16], index: 3, kind: input, shape index: {}]
  %s4 = inlined_call_operand.hbm [shape: f32[2,4,16,16], index: 4, kind: input, shape index: {}]
  %s5 = inlined_call_operand.hbm [shape: f32[2,4,16,16], index: 5, kind: input, shape index: {}]
  %s6 = inlined_call_operand.hbm [shape: f32[2,2,4,4,16], index: 6, kind: output, shape index: {}]
  %s7 = sld [smem:[#allocation0]]
  $region81: #{tpu_custom_call.1} parent=0
    _
  %s9 = ssub.s32 1, %s7
  %s10 = scalar_select 0, %s9, %s7
  $region1: #{tpu_custom_call.1} parent=0
    #allocation2 [shape = 'u8[32768]{0}', space=vmem, size = 0x8000, scoped, tag = 'input window, operand 0']
    #allocation3 [shape = 's32[2]{0}', space=sflag, size = 0x8, scoped, tag = 'scoped memory for tpu_custom_call.1']
    #allocation4 [shape = 's32[2]{0}', space=sflag, size = 0x8, scoped, tag = 'scoped memory for tpu_custom_call.1']
    #allocation5 [shape = 'u8[32768]{0}', space=vmem, size = 0x8000, scoped, tag = 'input window, operand 1']
    #allocation6 [shape = 's32[2]{0}', space=sflag, size = 0x8, scoped, tag = 'scoped memory for tpu_custom_call.1']
    #allocation7 [shape = 'u8[32768]{0}', space=vmem, size = 0x8000, scoped, tag = 'input window, operand 2']
    #allocation8 [shape = 'u8[32768]{0}', space=vmem, size = 0x8000, scoped, tag = 'input window, operand 3']
    #allocation9 [shape = 's32[2]{0}', space=sflag, size = 0x8, scoped, tag = 'scoped memory for tpu_custom_call.1']
    #allocation10 [shape = 'u8[32768]{0}', space=vmem, size = 0x8000, scoped, tag = 'input window, operand 4']
    #allocation11 [shape = 'u8[32768]{0}', space=vmem, size = 0x8000, scoped, tag = 'input window, operand 5']
    #allocation12 [shape = 's32[2]{0}', space=sflag, size = 0x8, scoped, tag = 'scoped memory for tpu_custom_call.1']
    #allocation13 [shape = 'u8[16384]{0}', space=vmem, size = 0x4000, scoped, tag = 'output window, operand 0']
    %11 = vsyncpa [#allocation3], 0
    %s12 = scalar_lea.sflag [#allocation3], 1
    %13 = vsyncpa %s12, 0
    %14 = vsyncpa [#allocation6], 0
    %s15 = scalar_lea.sflag [#allocation6], 1
    %16 = vsyncpa %s15, 0
    %17 = vsyncpa [#allocation9], 0
    %s18 = scalar_lea.sflag [#allocation9], 1
    %19 = vsyncpa %s18, 0
    %20 = vsyncpa [#allocation12], 0
    %s21 = scalar_lea.sflag [#allocation12], 1
    %22 = vsyncpa %s21, 0
    %23 = vsyncpa [#allocation4], 0
    %s24 = scalar_lea.sflag [#allocation4], 1
    %25 = vsyncpa %s24, 0
    loop: start=0, step=1, limit=6
    $region2: #{tpu_custom_call.1} parent=1 // loop_pre_header
      _
    $region3: #{tpu_custom_call.1} parent=1 // loop_header
      %s27 = sphi 0, %s31
      %p28 = scmp.ge.s32.totalorder %s27, 6
      %s34 = sphi 0, %s46
      %s35 = sphi 0, %s42
      %s36 = sphi 0, %s34
      %s37 = sphi 0, %s35
      %s38 = sphi 0, %s36
      %s39 = sphi 0, %s37
      %s51 = sphi 0, %s53
      %s54 = sphi 0, %s51
      %s55 = sphi 0, %s54
      %s71 = sphi 0, %s55
      %s85 = sphi 0, %s87
      %s88 = sphi 0, %s85
      %s89 = sphi 0, %s88
      %s105 = sphi 0, %s89
      %s119 = sphi 0, %s121
      %s122 = sphi 0, %s119
      %s123 = sphi 0, %s122
      %s139 = sphi 0, %s123
      %s147 = sphi 0, %s149
      %s150 = sphi 0, %s147
      %s151 = sphi 0, %s150
      %s167 = sphi 0, %s151
      %s181 = sphi 0, %s183
      %s184 = sphi 0, %s181
      %s185 = sphi 0, %s184
      %s201 = sphi 0, %s185
      %s215 = sphi 0, %s217
      %s218 = sphi 0, %s215
      %s219 = sphi 0, %s218
      %s235 = sphi 0, %s219
      %s243 = sphi 0, %s245
      %s246 = sphi 0, %s243
      %s247 = sphi 0, %s246
      %s263 = sphi 0, %s247
    $region4: #{tpu_custom_call.1} parent=1 // loop_header_branch
      %30 = sbr.rel (%p28) target = $region8
    $region5: #{tpu_custom_call.1} parent=1 // loop_body
      %s32 = ssub.s32 %s27, 1
      %s33 = ssub.s32 %s27, 2
      %s40 = sadd.s32 1, %s35
      %p41 = scmp.ge.s32.totalorder %s40, 2
      %s42 = scalar_select %p41, 0, %s40
      %s43 = sadd.s32 1, %s34
      %s44 = scalar_select %p41, %s43, %s34
      %p45 = scmp.ge.s32.totalorder %s44, 2
      %s46 = scalar_select %p45, 0, %s44
      %s47 = ssub.s32 %s34, %s46
      %s48 = ssub.s32 %s35, %s42
      %s49 = sor.u32 %s47, %s48
      %p50 = scmp.eq.s32.totalorder %s49, 0
      %s52 = sadd.s32 %s51, 1
      %s53 = scalar_select %p50, %s51, %s52
      %p56 = pneg %p50
      %p57 = scmp.eq.s32.totalorder %s27, 3
      %p58 = por %p56, %p57
      %p59 = scmp.ne.s32.totalorder %s51, %s54
      %p60 = scmp.eq.s32.totalorder %s27, 0
      %p61 = por %p59, %p60
      %p62 = scmp.ne.s32.totalorder %s51, %s54
      %p63 = scmp.eq.s32.totalorder %s32, 3
      %p64 = por %p62, %p63
      %p65 = scmp.ne.s32.totalorder %s54, %s55
      %p66 = scmp.eq.s32.totalorder %s32, 0
      %p67 = por %p65, %p66
      %p68 = scmp.ne.s32.totalorder %s54, %s55
      %p69 = scmp.eq.s32.totalorder %s33, 3
      %p70 = por %p68, %p69
      %p72 = scmp.ne.s32.totalorder %s55, %s71
      %p73 = scmp.eq.s32.totalorder %s33, 0
      %p74 = por %p72, %p73
      %s75 = ssub.s32 %s35, 1
      %p76 = scmp.gt.s32.totalorder %s75, 0
      %s77 = scalar_select %p76, %s75, 0
      %s78 = ssub.s32 %s42, 1
      %p79 = scmp.gt.s32.totalorder %s78, 0
      %s80 = scalar_select %p79, %s78, 0
      %s81 = ssub.s32 %s34, %s46
      %s82 = ssub.s32 %s77, %s80
      %s83 = sor.u32 %s81, %s82
      %p84 = scmp.eq.s32.totalorder %s83, 0
      %s86 = sadd.s32 %s85, 1
      %s87 = scalar_select %p84, %s85, %s86
      %p90 = pneg %p84
      %p91 = scmp.eq.s32.totalorder %s27, 3
      %p92 = por %p90, %p91
      %p93 = scmp.ne.s32.totalorder %s85, %s88
      %p94 = scmp.eq.s32.totalorder %s27, 0
      %p95 = por %p93, %p94
      %p96 = scmp.ne.s32.totalorder %s85, %s88
      %p97 = scmp.eq.s32.totalorder %s32, 3
      %p98 = por %p96, %p97
      %p99 = scmp.ne.s32.totalorder %s88, %s89
      %p100 = scmp.eq.s32.totalorder %s32, 0
      %p101 = por %p99, %p100
      %p102 = scmp.ne.s32.totalorder %s88, %s89
      %p103 = scmp.eq.s32.totalorder %s33, 3
      %p104 = por %p102, %p103
      %p106 = scmp.ne.s32.totalorder %s89, %s105
      %p107 = scmp.eq.s32.totalorder %s33, 0
      %p108 = por %p106, %p107
      %s109 = sadd.s32 %s35, 1
      %p110 = scmp.lt.s32.totalorder %s109, 1
      %s111 = scalar_select %p110, %s109, 1
      %s112 = sadd.s32 %s42, 1
      %p113 = scmp.lt.s32.totalorder %s112, 1
      %s114 = scalar_select %p113, %s112, 1
      %s115 = ssub.s32 %s34, %s46
      %s116 = ssub.s32 %s111, %s114
      %s117 = sor.u32 %s115, %s116
      %p118 = scmp.eq.s32.totalorder %s117, 0
      %s120 = sadd.s32 %s119, 1
      %s121 = scalar_select %p118, %s119, %s120
      %p124 = pneg %p118
      %p125 = scmp.eq.s32.totalorder %s27, 3
      %p126 = por %p124, %p125
      %p127 = scmp.ne.s32.totalorder %s119, %s122
      %p128 = scmp.eq.s32.totalorder %s27, 0
      %p129 = por %p127, %p128
      %p130 = scmp.ne.s32.totalorder %s119, %s122
      %p131 = scmp.eq.s32.totalorder %s32, 3
      %p132 = por %p130, %p131
      %p133 = scmp.ne.s32.totalorder %s122, %s123
      %p134 = scmp.eq.s32.totalorder %s32, 0
      %p135 = por %p133, %p134
      %p136 = scmp.ne.s32.totalorder %s122, %s123
      %p137 = scmp.eq.s32.totalorder %s33, 3
      %p138 = por %p136, %p137
      %p140 = scmp.ne.s32.totalorder %s123, %s139
      %p141 = scmp.eq.s32.totalorder %s33, 0
      %p142 = por %p140, %p141
      %s143 = ssub.s32 %s34, %s46
      %s144 = ssub.s32 %s35, %s42
      %s145 = sor.u32 %s143, %s144
      %p146 = scmp.eq.s32.totalorder %s145, 0
      %s148 = sadd.s32 %s147, 1
      %s149 = scalar_select %p146, %s147, %s148
      %p152 = pneg %p146
      %p153 = scmp.eq.s32.totalorder %s27, 3
      %p154 = por %p152, %p153
      %p155 = scmp.ne.s32.totalorder %s147, %s150
      %p156 = scmp.eq.s32.totalorder %s27, 0
      %p157 = por %p155, %p156
      %p158 = scmp.ne.s32.totalorder %s147, %s150
      %p159 = scmp.eq.s32.totalorder %s32, 3
      %p160 = por %p158, %p159
      %p161 = scmp.ne.s32.totalorder %s150, %s151
      %p162 = scmp.eq.s32.totalorder %s32, 0
      %p163 = por %p161, %p162
      %p164 = scmp.ne.s32.totalorder %s150, %s151
      %p165 = scmp.eq.s32.totalorder %s33, 3
      %p166 = por %p164, %p165
      %p168 = scmp.ne.s32.totalorder %s151, %s167
      %p169 = scmp.eq.s32.totalorder %s33, 0
      %p170 = por %p168, %p169
      %s171 = ssub.s32 %s35, 1
      %p172 = scmp.gt.s32.totalorder %s171, 0
      %s173 = scalar_select %p172, %s171, 0
      %s174 = ssub.s32 %s42, 1
      %p175 = scmp.gt.s32.totalorder %s174, 0
      %s176 = scalar_select %p175, %s174, 0
      %s177 = ssub.s32 %s34, %s46
      %s178 = ssub.s32 %s173, %s176
      %s179 = sor.u32 %s177, %s178
      %p180 = scmp.eq.s32.totalorder %s179, 0
      %s182 = sadd.s32 %s181, 1
      %s183 = scalar_select %p180, %s181, %s182
      %p186 = pneg %p180
      %p187 = scmp.eq.s32.totalorder %s27, 3
      %p188 = por %p186, %p187
      %p189 = scmp.ne.s32.totalorder %s181, %s184
      %p190 = scmp.eq.s32.totalorder %s27, 0
      %p191 = por %p189, %p190
      %p192 = scmp.ne.s32.totalorder %s181, %s184
      %p193 = scmp.eq.s32.totalorder %s32, 3
      %p194 = por %p192, %p193
      %p195 = scmp.ne.s32.totalorder %s184, %s185
      %p196 = scmp.eq.s32.totalorder %s32, 0
      %p197 = por %p195, %p196
      %p198 = scmp.ne.s32.totalorder %s184, %s185
      %p199 = scmp.eq.s32.totalorder %s33, 3
      %p200 = por %p198, %p199
      %p202 = scmp.ne.s32.totalorder %s185, %s201
      %p203 = scmp.eq.s32.totalorder %s33, 0
      %p204 = por %p202, %p203
      %s205 = sadd.s32 %s35, 1
      %p206 = scmp.lt.s32.totalorder %s205, 1
      %s207 = scalar_select %p206, %s205, 1
      %s208 = sadd.s32 %s42, 1
      %p209 = scmp.lt.s32.totalorder %s208, 1
      %s210 = scalar_select %p209, %s208, 1
      %s211 = ssub.s32 %s34, %s46
      %s212 = ssub.s32 %s207, %s210
      %s213 = sor.u32 %s211, %s212
      %p214 = scmp.eq.s32.totalorder %s213, 0
      %s216 = sadd.s32 %s215, 1
      %s217 = scalar_select %p214, %s215, %s216
      %p220 = pneg %p214
      %p221 = scmp.eq.s32.totalorder %s27, 3
      %p222 = por %p220, %p221
      %p223 = scmp.ne.s32.totalorder %s215, %s218
      %p224 = scmp.eq.s32.totalorder %s27, 0
      %p225 = por %p223, %p224
      %p226 = scmp.ne.s32.totalorder %s215, %s218
      %p227 = scmp.eq.s32.totalorder %s32, 3
      %p228 = por %p226, %p227
      %p229 = scmp.ne.s32.totalorder %s218, %s219
      %p230 = scmp.eq.s32.totalorder %s32, 0
      %p231 = por %p229, %p230
      %p232 = scmp.ne.s32.totalorder %s218, %s219
      %p233 = scmp.eq.s32.totalorder %s33, 3
      %p234 = por %p232, %p233
      %p236 = scmp.ne.s32.totalorder %s219, %s235
      %p237 = scmp.eq.s32.totalorder %s33, 0
      %p238 = por %p236, %p237
      %s239 = ssub.s32 %s34, %s46
      %s240 = ssub.s32 %s35, %s42
      %s241 = sor.u32 %s239, %s240
      %p242 = scmp.eq.s32.totalorder %s241, 0
      %s244 = sadd.s32 %s243, 1
      %s245 = scalar_select %p242, %s243, %s244
      %p248 = pneg %p242
      %p249 = scmp.eq.s32.totalorder %s27, 3
      %p250 = por %p248, %p249
      %p251 = scmp.ne.s32.totalorder %s243, %s246
      %p252 = scmp.eq.s32.totalorder %s27, 0
      %p253 = por %p251, %p252
      %p254 = scmp.ne.s32.totalorder %s243, %s246
      %p255 = scmp.eq.s32.totalorder %s32, 3
      %p256 = por %p254, %p255
      %p257 = scmp.ne.s32.totalorder %s246, %s247
      %p258 = scmp.eq.s32.totalorder %s32, 0
      %p259 = por %p257, %p258
      %p260 = scmp.ne.s32.totalorder %s246, %s247
      %p261 = scmp.eq.s32.totalorder %s33, 3
      %p262 = por %p260, %p261
      %p264 = scmp.ne.s32.totalorder %s247, %s263
      %p265 = scmp.eq.s32.totalorder %s33, 0
      %p266 = por %p264, %p265
      %p267 = scmp.le.s32.totalorder 1, %s27
      %p268 = scmp.lt.s32.totalorder %s27, 5
      %p269 = pnand %p267, %p268
      %p270 = pneg %p269
      // Predicated region
      $region9: #{tpu_custom_call.1} parent=5 // pred_check
        _
      $region10: #{tpu_custom_call.1} parent=5 // pred_check_branch
        %272 = sbr.rel (%p269) target = $region12
      $region11: #{tpu_custom_call.1} parent=5 // pred_region
        %s273 = ssub.s32 %s27, 1
      $region12: #{tpu_custom_call.1} parent=5 // pred_fallthru
        _
      %p274 = scmp.lt.s32.totalorder %s27, 4
      // Predicated region
      $region13: #{tpu_custom_call.1} parent=5 // pred_check
        %p275 = pneg %p274
      $region14: #{tpu_custom_call.1} parent=5 // pred_check_branch
        %277 = sbr.rel (%p275) target = $region16
      $region15: #{tpu_custom_call.1} parent=5 // pred_region
        // Predicated region
        $region17: #{tpu_custom_call.1} parent=15 // pred_check
          %p278 = pneg %p61
        $region18: #{tpu_custom_call.1} parent=15 // pred_check_branch
          %280 = sbr.rel (%p278) target = $region20
        $region19: #{tpu_custom_call.1} parent=15 // pred_region
          %s281 = sand.u32 %s51, 1
          %s282 = scalar_lea.sflag [#allocation3], %s281
          %s283 = sand.u32 %s51, 1
          %s284 = smul.addr %s283, 32
          %s285 = scalar_lea.vmem [#allocation2], %s284
          %s287 = ssub.s32 512, 512
          %288 = vsyncadd %s282, %s287
          %s289 = smul.addr %s34, 8
          %s290 = sadd.s32 %s35, %s289
          %s291 = smul.addr %s290, 128
          %s292 = scalar_lea.hbm %s0, %s291
          %s293 = sshll.u32 %s285, 4
          %s294 = int_to_ptr.vmem [resolvable:$true] %s293
          %299 = dma.hbm_to_vmem [thread:$0]  %s292, 512, %s294, %s282, 256, 128, 8
        $region20: #{tpu_custom_call.1} parent=15 // pred_fallthru
          _
        // Predicated region
        $region21: #{tpu_custom_call.1} parent=15 // pred_check
          %p300 = pneg %p95
        $region22: #{tpu_custom_call.1} parent=15 // pred_check_branch
          %302 = sbr.rel (%p300) target = $region24
        $region23: #{tpu_custom_call.1} parent=15 // pred_region
          %s303 = sand.u32 %s27, 1
          %s304 = scalar_lea.sflag [#allocation6], %s303
          %s305 = sand.u32 %s85, 1
          %s306 = smul.addr %s305, 32
          %s307 = scalar_lea.vmem [#allocation5], %s306
          %s308 = ssub.s32 %s35, 1
          %p309 = scmp.gt.s32.totalorder %s308, 0
          %s310 = scalar_select %p309, %s308, 0
          %s312 = ssub.s32 512, 512
          %313 = vsyncadd %s304, %s312
          %s314 = smul.addr %s34, 8
          %s315 = sadd.s32 %s310, %s314
          %s316 = smul.addr %s315, 128
          %s317 = scalar_lea.hbm %s1, %s316
          %s318 = sshll.u32 %s307, 4
          %s319 = int_to_ptr.vmem [resolvable:$true] %s318
          %324 = dma.hbm_to_vmem [thread:$0]  %s317, 512, %s319, %s304, 256, 128, 8
        $region24: #{tpu_custom_call.1} parent=15 // pred_fallthru
          _
        // Predicated region
        $region25: #{tpu_custom_call.1} parent=15 // pred_check
          %p325 = pneg %p129
        $region26: #{tpu_custom_call.1} parent=15 // pred_check_branch
          %327 = sbr.rel (%p325) target = $region28
        $region27: #{tpu_custom_call.1} parent=15 // pred_region
          %s328 = sand.u32 %s27, 1
          %s329 = scalar_lea.sflag [#allocation6], %s328
          %s330 = sand.u32 %s119, 1
          %s331 = smul.addr %s330, 32
          %s332 = scalar_lea.vmem [#allocation7], %s331
          %s333 = sadd.s32 %s35, 1
          %p334 = scmp.lt.s32.totalorder %s333, 1
          %s335 = scalar_select %p334, %s333, 1
          %s337 = ssub.s32 512, 512
          %338 = vsyncadd %s329, %s337
          %s339 = smul.addr %s34, 8
          %s340 = sadd.s32 %s335, %s339
          %s341 = smul.addr %s340, 128
          %s342 = scalar_lea.hbm %s2, %s341
          %s343 = sshll.u32 %s332, 4
          %s344 = int_to_ptr.vmem [resolvable:$true] %s343
          %349 = dma.hbm_to_vmem [thread:$0]  %s342, 512, %s344, %s329, 256, 128, 8
        $region28: #{tpu_custom_call.1} parent=15 // pred_fallthru
          _
        // Predicated region
        $region29: #{tpu_custom_call.1} parent=15 // pred_check
          %p350 = pneg %p157
        $region30: #{tpu_custom_call.1} parent=15 // pred_check_branch
          %352 = sbr.rel (%p350) target = $region32
        $region31: #{tpu_custom_call.1} parent=15 // pred_region
          %s353 = sand.u32 %s27, 1
          %s354 = scalar_lea.sflag [#allocation9], %s353
          %s355 = sand.u32 %s147, 1
          %s356 = smul.addr %s355, 32
          %s357 = scalar_lea.vmem [#allocation8], %s356
          %s359 = ssub.s32 512, 512
          %360 = vsyncadd %s354, %s359
          %s361 = smul.addr %s34, 8
          %s362 = sadd.s32 %s35, %s361
          %s363 = smul.addr %s362, 128
          %s364 = scalar_lea.hbm %s3, %s363
          %s365 = sshll.u32 %s357, 4
          %s366 = int_to_ptr.vmem [resolvable:$true] %s365
          %371 = dma.hbm_to_vmem [thread:$0]  %s364, 512, %s366, %s354, 256, 128, 8
        $region32: #{tpu_custom_call.1} parent=15 // pred_fallthru
          _
        // Predicated region
        $region33: #{tpu_custom_call.1} parent=15 // pred_check
          %p372 = pneg %p191
        $region34: #{tpu_custom_call.1} parent=15 // pred_check_branch
          %374 = sbr.rel (%p372) target = $region36
        $region35: #{tpu_custom_call.1} parent=15 // pred_region
          %s375 = sand.u32 %s27, 1
          %s376 = scalar_lea.sflag [#allocation9], %s375
          %s377 = sand.u32 %s181, 1
          %s378 = smul.addr %s377, 32
          %s379 = scalar_lea.vmem [#allocation10], %s378
          %s380 = ssub.s32 %s35, 1
          %p381 = scmp.gt.s32.totalorder %s380, 0
          %s382 = scalar_select %p381, %s380, 0
          %s384 = ssub.s32 512, 512
          %385 = vsyncadd %s376, %s384
          %s386 = smul.addr %s34, 8
          %s387 = sadd.s32 %s382, %s386
          %s388 = smul.addr %s387, 128
          %s389 = scalar_lea.hbm %s4, %s388
          %s390 = sshll.u32 %s379, 4
          %s391 = int_to_ptr.vmem [resolvable:$true] %s390
          %396 = dma.hbm_to_vmem [thread:$0]  %s389, 512, %s391, %s376, 256, 128, 8
        $region36: #{tpu_custom_call.1} parent=15 // pred_fallthru
          _
        // Predicated region
        $region37: #{tpu_custom_call.1} parent=15 // pred_check
          %p397 = pneg %p225
        $region38: #{tpu_custom_call.1} parent=15 // pred_check_branch
          %399 = sbr.rel (%p397) target = $region40
        $region39: #{tpu_custom_call.1} parent=15 // pred_region
          %s400 = sand.u32 %s215, 1
          %s401 = scalar_lea.sflag [#allocation12], %s400
          %s402 = sand.u32 %s215, 1
          %s403 = smul.addr %s402, 32
          %s404 = scalar_lea.vmem [#allocation11], %s403
          %s405 = sadd.s32 %s35, 1
          %p406 = scmp.lt.s32.totalorder %s405, 1
          %s407 = scalar_select %p406, %s405, 1
          %s409 = ssub.s32 512, 512
          %410 = vsyncadd %s401, %s409
          %s411 = smul.addr %s34, 8
          %s412 = sadd.s32 %s407, %s411
          %s413 = smul.addr %s412, 128
          %s414 = scalar_lea.hbm %s5, %s413
          %s415 = sshll.u32 %s404, 4
          %s416 = int_to_ptr.vmem [resolvable:$true] %s415
          %421 = dma.hbm_to_vmem [thread:$0]  %s414, 512, %s416, %s401, 256, 128, 8
        $region40: #{tpu_custom_call.1} parent=15 // pred_fallthru
          _
      $region16: #{tpu_custom_call.1} parent=5 // pred_fallthru
        _
      %p422 = scmp.le.s32.totalorder 1, %s27
      %p423 = scmp.lt.s32.totalorder %s27, 5
      %p424 = pnand %p422, %p423
      %p425 = pneg %p424
      // Predicated region
      $region41: #{tpu_custom_call.1} parent=5 // pred_check
        _
      $region42: #{tpu_custom_call.1} parent=5 // pred_check_branch
        %427 = sbr.rel (%p424) target = $region44
      $region43: #{tpu_custom_call.1} parent=5 // pred_region
        %s428 = ssub.s32 %s27, 1
        %s429 = sand.u32 %s54, 1
        %s430 = scalar_lea.sflag [#allocation3], %s429
        %s431 = sand.u32 %s54, 1
        %s432 = smul.addr %s431, 32
        %s433 = scalar_lea.vmem [#allocation2], %s432
        // Predicated region
        $region45: #{tpu_custom_call.1} parent=43 // pred_check
          %p434 = pneg %p67
        $region46: #{tpu_custom_call.1} parent=43 // pred_check_branch
          %436 = sbr.rel (%p434) target = $region48
        $region47: #{tpu_custom_call.1} parent=43 // pred_region
          %437 = dma.done %s430, 512
        $region48: #{tpu_custom_call.1} parent=43 // pred_fallthru
          _
        %s438 = sand.u32 %s32, 1
        %s439 = scalar_lea.sflag [#allocation6], %s438
        %s440 = sand.u32 %s88, 1
        %s441 = smul.addr %s440, 32
        %s442 = scalar_lea.vmem [#allocation5], %s441
        // Predicated region
        $region49: #{tpu_custom_call.1} parent=43 // pred_check
          %p443 = pneg %p101
        $region50: #{tpu_custom_call.1} parent=43 // pred_check_branch
          %445 = sbr.rel (%p443) target = $region52
        $region51: #{tpu_custom_call.1} parent=43 // pred_region
          %446 = dma.done %s439, 512
        $region52: #{tpu_custom_call.1} parent=43 // pred_fallthru
          _
        %s447 = sand.u32 %s32, 1
        %s448 = scalar_lea.sflag [#allocation6], %s447
        %s449 = sand.u32 %s122, 1
        %s450 = smul.addr %s449, 32
        %s451 = scalar_lea.vmem [#allocation7], %s450
        // Predicated region
        $region53: #{tpu_custom_call.1} parent=43 // pred_check
          %p452 = pneg %p135
        $region54: #{tpu_custom_call.1} parent=43 // pred_check_branch
          %454 = sbr.rel (%p452) target = $region56
        $region55: #{tpu_custom_call.1} parent=43 // pred_region
          %455 = dma.done %s448, 512
        $region56: #{tpu_custom_call.1} parent=43 // pred_fallthru
          _
        %s456 = sand.u32 %s32, 1
        %s457 = scalar_lea.sflag [#allocation9], %s456
        %s458 = sand.u32 %s150, 1
        %s459 = smul.addr %s458, 32
        %s460 = scalar_lea.vmem [#allocation8], %s459
        // Predicated region
        $region57: #{tpu_custom_call.1} parent=43 // pred_check
          %p461 = pneg %p163
        $region58: #{tpu_custom_call.1} parent=43 // pred_check_branch
          %463 = sbr.rel (%p461) target = $region60
        $region59: #{tpu_custom_call.1} parent=43 // pred_region
          %464 = dma.done %s457, 512
        $region60: #{tpu_custom_call.1} parent=43 // pred_fallthru
          _
        %s465 = sand.u32 %s32, 1
        %s466 = scalar_lea.sflag [#allocation9], %s465
        %s467 = sand.u32 %s184, 1
        %s468 = smul.addr %s467, 32
        %s469 = scalar_lea.vmem [#allocation10], %s468
        // Predicated region
        $region61: #{tpu_custom_call.1} parent=43 // pred_check
          %p470 = pneg %p197
        $region62: #{tpu_custom_call.1} parent=43 // pred_check_branch
          %472 = sbr.rel (%p470) target = $region64
        $region63: #{tpu_custom_call.1} parent=43 // pred_region
          %473 = dma.done %s466, 512
        $region64: #{tpu_custom_call.1} parent=43 // pred_fallthru
          _
        %s474 = sand.u32 %s218, 1
        %s475 = scalar_lea.sflag [#allocation12], %s474
        %s476 = sand.u32 %s218, 1
        %s477 = smul.addr %s476, 32
        %s478 = scalar_lea.vmem [#allocation11], %s477
        // Predicated region
        $region65: #{tpu_custom_call.1} parent=43 // pred_check
          %p479 = pneg %p231
        $region66: #{tpu_custom_call.1} parent=43 // pred_check_branch
          %481 = sbr.rel (%p479) target = $region68
        $region67: #{tpu_custom_call.1} parent=43 // pred_region
          %482 = dma.done %s475, 512
        $region68: #{tpu_custom_call.1} parent=43 // pred_fallthru
          _
        %s483 = sand.u32 %s54, 1
        %s484 = scalar_lea.sflag [#allocation3], %s483
        %s485 = sand.u32 %s54, 1
        %s486 = smul.addr %s485, 32
        %s487 = scalar_lea.vmem [#allocation2], %s486
        %p488 = pneg %p67
        %p489 = pneg %p64
        %s490 = sand.u32 %s32, 1
        %s491 = scalar_lea.sflag [#allocation6], %s490
        %s492 = sand.u32 %s88, 1
        %s493 = smul.addr %s492, 32
        %s494 = scalar_lea.vmem [#allocation5], %s493
        %p495 = pneg %p101
        %p496 = pneg %p98
        %s497 = sand.u32 %s32, 1
        %s498 = scalar_lea.sflag [#allocation6], %s497
        %s499 = sand.u32 %s122, 1
        %s500 = smul.addr %s499, 32
        %s501 = scalar_lea.vmem [#allocation7], %s500
        %p502 = pneg %p135
        %p503 = pneg %p132
        %s504 = sand.u32 %s32, 1
        %s505 = scalar_lea.sflag [#allocation9], %s504
        %s506 = sand.u32 %s150, 1
        %s507 = smul.addr %s506, 32
        %s508 = scalar_lea.vmem [#allocation8], %s507
        %p509 = pneg %p163
        %p510 = pneg %p160
        %s511 = sand.u32 %s32, 1
        %s512 = scalar_lea.sflag [#allocation9], %s511
        %s513 = sand.u32 %s184, 1
        %s514 = smul.addr %s513, 32
        %s515 = scalar_lea.vmem [#allocation10], %s514
        %p516 = pneg %p197
        %p517 = pneg %p194
        %s518 = sand.u32 %s218, 1
        %s519 = scalar_lea.sflag [#allocation12], %s518
        %s520 = sand.u32 %s218, 1
        %s521 = smul.addr %s520, 32
        %s522 = scalar_lea.vmem [#allocation11], %s521
        %p523 = pneg %p231
        %p524 = pneg %p228
        %p525 = pneg %p259
        %p526 = pneg %p256
        %s527 = sand.u32 %s246, 1
        %s528 = scalar_lea.sflag [#allocation4], %s527
        %s529 = sand.u32 %s246, 1
        %s530 = smul.addr %s529, 16
        %s531 = scalar_lea.vmem [#allocation13], %s530
        %s532 = ssub.s32 %s37, 1
        %p533 = scmp.gt.s32.totalorder %s532, 0
        %s534 = scalar_select %p533, %s532, 0
        %s535 = sadd.s32 %s37, 1
        %p536 = scmp.lt.s32.totalorder %s535, 1
        %s537 = scalar_select %p536, %s535, 1
        %s538 = ssub.s32 %s37, 1
        %p539 = scmp.gt.s32.totalorder %s538, 0
        %s540 = scalar_select %p539, %s538, 0
        %s541 = sadd.s32 %s37, 1
        %p542 = scmp.lt.s32.totalorder %s541, 1
        %s543 = scalar_select %p542, %s541, 1
        %v544 = vld [vmem:[%s442] sm:$0xff]
        %v545 = vld [vmem:[%s442 + $0x8] sm:$0xff]
        %v546 = vld [vmem:[%s442 + $0x10] sm:$0xff]
        %v547 = vld [vmem:[%s442 + $0x18] sm:$0xff]
        %v548 = vld [vmem:[%s433] sm:$0xff]
        %v549 = vld [vmem:[%s433 + $0x8] sm:$0xff]
        %v550 = vld [vmem:[%s433 + $0x10] sm:$0xff]
        %v551 = vld [vmem:[%s433 + $0x18] sm:$0xff]
        %v552 = vld [vmem:[%s451] sm:$0xff]
        %v553 = vld [vmem:[%s451 + $0x8] sm:$0xff]
        %v554 = vld [vmem:[%s451 + $0x10] sm:$0xff]
        %v555 = vld [vmem:[%s451 + $0x18] sm:$0xff]
        %v556 = vld [vmem:[%s469] sm:$0xff]
        %v557 = vld [vmem:[%s469 + $0x8] sm:$0xff]
        %v558 = vld [vmem:[%s469 + $0x10] sm:$0xff]
        %v559 = vld [vmem:[%s469 + $0x18] sm:$0xff]
        %v560 = vld [vmem:[%s460] sm:$0xff]
        %v561 = vld [vmem:[%s460 + $0x8] sm:$0xff]
        %v562 = vld [vmem:[%s460 + $0x10] sm:$0xff]
        %v563 = vld [vmem:[%s460 + $0x18] sm:$0xff]
        %v564 = vld [vmem:[%s478] sm:$0xff]
        %v565 = vld [vmem:[%s478 + $0x8] sm:$0xff]
        %v566 = vld [vmem:[%s478 + $0x10] sm:$0xff]
        %v567 = vld [vmem:[%s478 + $0x18] sm:$0xff]
        %v568 = vmax.f32 %v544, %v545
        %v569 = vmax.f32 %v548, %v549
        %v570 = vmax.f32 %v552, %v553
        %v571 = vmax.f32 %v568, %v546
        %v572 = vmax.f32 %v569, %v550
        %v573 = vmax.f32 %v570, %v554
        %v574 = vmax.f32 %v571, %v547
        %v575 = vmax.f32 %v572, %v551
        %v576 = vmax.f32 %v573, %v555
        %v577 = vsub.f32 %v544, %v574
        %v578 = vsub.f32 %v548, %v575
        %v579 = vsub.f32 %v552, %v576
        %v580 = vmul.f32 %v577, 1.442695
        %v581 = vpow.pop %v580
        %v582 = vmul.f32 %v578, 1.442695
        %v583 = vpow.pop %v582
        %v584 = vmul.f32 %v579, 1.442695
        %v585 = vpow.pop %v584
        %v586 = vsub.f32 %v545, %v574
        %v587 = vsub.f32 %v549, %v575
        %v588 = vsub.f32 %v553, %v576
        %v589 = vmul.f32 %v586, 1.442695
        %v590 = vpow.pop %v589
        %v591 = vmul.f32 %v587, 1.442695
        %v592 = vpow.pop %v591
        %v593 = vmul.f32 %v588, 1.442695
        %v594 = vpow.pop %v593
        %v595 = vadd.f32 %v581, %v590
        %v596 = vadd.f32 %v583, %v592
        %v597 = vadd.f32 %v585, %v594
        %v598 = vsub.f32 %v546, %v574
        %v599 = vsub.f32 %v550, %v575
        %v600 = vsub.f32 %v554, %v576
        %v601 = vmul.f32 %v598, 1.442695
        %v602 = vpow.pop %v601
        %v603 = vmul.f32 %v599, 1.442695
        %v604 = vpow.pop %v603
        %v605 = vmul.f32 %v600, 1.442695
        %v606 = vpow.pop %v605
        %v607 = vadd.f32 %v595, %v602
        %v608 = vadd.f32 %v596, %v604
        %v609 = vadd.f32 %v597, %v606
        %v610 = vsub.f32 %v547, %v574
        %v611 = vsub.f32 %v551, %v575
        %v612 = vsub.f32 %v555, %v576
        %v613 = vmul.f32 %v610, 1.442695
        %v614 = vpow.pop %v613
        %v615 = vmul.f32 %v611, 1.442695
        %v616 = vpow.pop %v615
        %v617 = vmul.f32 %v612, 1.442695
        %v618 = vpow.pop %v617
        %v619 = vadd.f32 %v607, %v614
        %v620 = vadd.f32 %v608, %v616
        %v621 = vadd.f32 %v609, %v618
        %v622 = vrcp.pop %v619
        %v623 = vmul.f32 1.0, %v622
        %v624 = vrcp.pop %v620
        %v625 = vmul.f32 1.0, %v624
        %v626 = vrcp.pop %v621
        %v627 = vmul.f32 1.0, %v626
        %s628 = smul.u32 %s37, 8
        %s629 = ssub.s32 %s628, 8
        %v630 = vlaneseq
        %v631 = vshrl.u32 %v630, 7
        %v632 = vadd.s32 %v631, 8
        %v633 = vadd.s32 %v631, 16
        %v634 = vstv %s629
        %v635 = vadd.s32 %v631, %v634
        %v636 = vadd.s32 %v632, %v634
        %v637 = vadd.s32 %v633, %v634
        %vm638 = vcmp.ge.s32.totalorder %v635, 0
        %vm639 = vcmp.ge.s32.totalorder %v636, 0
        %vm640 = vcmp.ge.s32.totalorder %v637, 0
        %vm641 = vcmp.lt.s32.totalorder %v635, 16
        %vm642 = vcmp.lt.s32.totalorder %v636, 16
        %vm643 = vcmp.lt.s32.totalorder %v637, 16
        %vm644 = vmand %vm638, %vm641
        %vm645 = vmand %vm639, %vm642
        %vm646 = vmand %vm640, %vm643
        %v647 = vmul.f32 %v581, %v623
        %v648 = vmul.f32 %v583, %v625
        %v649 = vmul.f32 %v585, %v627
        %v650 = vsel %vm644, 1, 0
        %v651 = vsel %vm645, 1, 0
        %v652 = vsel %vm646, 1, 0
        %vm653 = vcmp.eq.s32.totalorder %v650, 1
        %vm654 = vcmp.eq.s32.totalorder %v651, 1
        %vm655 = vcmp.eq.s32.totalorder %v652, 1
        %v656 = vsel %vm653, %v647, 1e+30
        %v657 = vsel %vm654, %v648, 1e+30
        %v658 = vsel %vm655, %v649, 1e+30
        %vm662 = vcmask 1046528
        %v663 = vrot.slane %v656, 1
        %v664 = vrot.slane %v657, 1
        %v665 = vsel %vm662, %v663, %v664
        %v666 = vrot.slane %v658, 1
        %v667 = vsel %vm662, %v664, %v666
        %v671 = vmin.f32 %v656, %v665
        %v672 = vmin.f32 %v657, %v667
        %v673 = vmin.f32 %v658, %v666
        %vm674 = vcmask 1045504
        %v675 = vrot.slane %v656, 2
        %v676 = vrot.slane %v657, 2
        %v677 = vsel %vm674, %v675, %v676
        %v678 = vrot.slane %v658, 2
        %v679 = vsel %vm674, %v676, %v678
        %v683 = vmin.f32 %v671, %v677
        %v684 = vmin.f32 %v672, %v679
        %v685 = vmin.f32 %v673, %v678
        %689 = vrot.lane.b32.xlu0 %v683, 127
        %v690 = vpop.permute.xlu0 %689
        %691 = vrot.lane.b32.xlu0 %v684, 127
        %v692 = vpop.permute.xlu0 %691
        %693 = vrot.lane.b32.xlu0 %v685, 127
        %v694 = vpop.permute.xlu0 %693
        %vm698 = vcmask 121856
        %v699 = vsel %vm698, %v690, 1e+30
        %v700 = vsel %vm698, %v692, 1e+30
        %v701 = vsel %vm698, %v694, 1e+30
        %v702 = vmin.f32 %v683, %v699
        %v703 = vmin.f32 %v684, %v700
        %v704 = vmin.f32 %v685, %v701
        %705 = vrot.lane.b32.xlu0 %v683, 1
        %v706 = vpop.permute.xlu0 %705
        %707 = vrot.lane.b32.xlu0 %v684, 1
        %v708 = vpop.permute.xlu0 %707
        %709 = vrot.lane.b32.xlu0 %v685, 1
        %v710 = vpop.permute.xlu0 %709
        %vm714 = vcmask 7168
        %v715 = vsel %vm714, 1e+30, %v706
        %v716 = vsel %vm714, 1e+30, %v708
        %v717 = vsel %vm714, 1e+30, %v710
        %v718 = vmin.f32 %v702, %v715
        %v719 = vmin.f32 %v703, %v716
        %v720 = vmin.f32 %v704, %v717
        %vm724 = vcmask 1040384
        %v725 = vrot.slane %v718, 7
        %v726 = vrot.slane %v719, 7
        %v727 = vsel %vm724, %v725, %v726
        %v728 = vrot.slane %v720, 7
        %v729 = vsel %vm724, %v726, %v728
        %v733 = vsub.f32 %v656, %v725
        %v734 = vsub.f32 %v657, %v727
        %v735 = vsub.f32 %v658, %v729
        %v736 = vsel %vm653, %v733, -1e+30
        %v737 = vsel %vm654, %v734, -1e+30
        %v738 = vsel %vm655, %v735, -1e+30
        %v742 = vrot.slane %v736, 1
        %v743 = vrot.slane %v737, 1
        %v744 = vsel %vm662, %v742, %v743
        %v745 = vrot.slane %v738, 1
        %v746 = vsel %vm662, %v743, %v745
        %v750 = vmax.f32 %v736, %v744
        %v751 = vmax.f32 %v737, %v746
        %v752 = vmax.f32 %v738, %v745
        %v753 = vrot.slane %v736, 2
        %v754 = vrot.slane %v737, 2
        %v755 = vsel %vm674, %v753, %v754
        %v756 = vrot.slane %v738, 2
        %v757 = vsel %vm674, %v754, %v756
        %v761 = vmax.f32 %v750, %v755
        %v762 = vmax.f32 %v751, %v757
        %v763 = vmax.f32 %v752, %v756
        %vm764 = vcmask 1044480
        %v765 = vrot.slane %v736, 3
        %v766 = vrot.slane %v737, 3
        %v767 = vsel %vm764, %v765, %v766
        %v768 = vrot.slane %v738, 3
        %v769 = vsel %vm764, %v766, %v768
        %v773 = vmax.f32 %v761, %v767
        %v774 = vmax.f32 %v762, %v769
        %v775 = vmax.f32 %v763, %v768
        %vm776 = vcmask 1043456
        %v777 = vrot.slane %v736, 4
        %v778 = vrot.slane %v737, 4
        %v779 = vsel %vm776, %v777, %v778
        %v780 = vrot.slane %v738, 4
        %v781 = vsel %vm776, %v778, %v780
        %v785 = vmax.f32 %v773, %v779
        %v786 = vmax.f32 %v774, %v781
        %v787 = vmax.f32 %v775, %v780
        %790 = vrot.lane.b32.xlu0 %v785, 127
        %v791 = vpop.permute.xlu0 %790
        %792 = vrot.lane.b32.xlu0 %v786, 127
        %v793 = vpop.permute.xlu0 %792
        %v796 = vsel %vm698, %v791, -1e+30
        %v797 = vsel %vm698, %v793, -1e+30
        %v798 = vmax.f32 %v785, %v796
        %v799 = vmax.f32 %v786, %v797
        %v801 = vrot.slane %v785, 1
        %v802 = vrot.slane %v786, 1
        %v803 = vsel %vm662, %v801, %v802
        %v804 = vrot.slane %v787, 1
        %v805 = vsel %vm662, %v802, %v804
        %806 = vrot.lane.b32.xlu0 %v803, 1
        %v807 = vpop.permute.xlu0 %806
        %808 = vrot.lane.b32.xlu0 %v805, 1
        %v809 = vpop.permute.xlu0 %808
        %v812 = vsel %vm714, -1e+30, %v807
        %v813 = vsel %vm714, -1e+30, %v809
        %v816 = vrot.slane %v812, 7
        %v817 = vrot.slane %v813, 7
        %v818 = vsel %vm724, %v816, %v817
        %v821 = vmax.f32 %v798, %v816
        %v822 = vmax.f32 %v799, %v818
        %823 = vrot.lane.b32.xlu0 %v785, 126
        %v824 = vpop.permute.xlu0 %823
        %825 = vrot.lane.b32.xlu0 %v786, 126
        %v826 = vpop.permute.xlu0 %825
        %vm829 = vcmask 113664
        %v830 = vsel %vm829, %v824, -1e+30
        %v831 = vsel %vm829, %v826, -1e+30
        %v832 = vmax.f32 %v821, %v830
        %v833 = vmax.f32 %v822, %v831
        %834 = vrot.lane.b32.xlu0 %v803, 2
        %v835 = vpop.permute.xlu0 %834
        %836 = vrot.lane.b32.xlu0 %v805, 2
        %v837 = vpop.permute.xlu0 %836
        %vm840 = vcmask 15360
        %v841 = vsel %vm840, -1e+30, %v835
        %v842 = vsel %vm840, -1e+30, %v837
        %v845 = vrot.slane %v841, 7
        %v846 = vrot.slane %v842, 7
        %v847 = vsel %vm724, %v845, %v846
        %v850 = vmax.f32 %v832, %v845
        %v851 = vmax.f32 %v833, %v847
        %v852 = vsel %vm653, %v556, 1e+30
        %v853 = vsel %vm654, %v560, 1e+30
        %v854 = vsel %vm655, %v564, 1e+30
        %v858 = vrot.slane %v852, 1
        %v859 = vrot.slane %v853, 1
        %v860 = vsel %vm662, %v858, %v859
        %v861 = vrot.slane %v854, 1
        %v862 = vsel %vm662, %v859, %v861
        %v866 = vmin.f32 %v852, %v860
        %v867 = vmin.f32 %v853, %v862
        %v868 = vmin.f32 %v854, %v861
        %v869 = vrot.slane %v852, 2
        %v870 = vrot.slane %v853, 2
        %v871 = vsel %vm674, %v869, %v870
        %v872 = vrot.slane %v854, 2
        %v873 = vsel %vm674, %v870, %v872
        %v877 = vmin.f32 %v866, %v871
        %v878 = vmin.f32 %v867, %v873
        %v879 = vmin.f32 %v868, %v872
        %883 = vrot.lane.b32.xlu0 %v877, 127
        %v884 = vpop.permute.xlu0 %883
        %885 = vrot.lane.b32.xlu0 %v878, 127
        %v886 = vpop.permute.xlu0 %885
        %887 = vrot.lane.b32.xlu0 %v879, 127
        %v888 = vpop.permute.xlu0 %887
        %v892 = vsel %vm698, %v884, 1e+30
        %v893 = vsel %vm698, %v886, 1e+30
        %v894 = vsel %vm698, %v888, 1e+30
        %v895 = vmin.f32 %v877, %v892
        %v896 = vmin.f32 %v878, %v893
        %v897 = vmin.f32 %v879, %v894
        %898 = vrot.lane.b32.xlu0 %v877, 1
        %v899 = vpop.permute.xlu0 %898
        %900 = vrot.lane.b32.xlu0 %v878, 1
        %v901 = vpop.permute.xlu0 %900
        %902 = vrot.lane.b32.xlu0 %v879, 1
        %v903 = vpop.permute.xlu0 %902
        %v907 = vsel %vm714, 1e+30, %v899
        %v908 = vsel %vm714, 1e+30, %v901
        %v909 = vsel %vm714, 1e+30, %v903
        %v910 = vmin.f32 %v895, %v907
        %v911 = vmin.f32 %v896, %v908
        %v912 = vmin.f32 %v897, %v909
        %v916 = vrot.slane %v910, 7
        %v917 = vrot.slane %v911, 7
        %v918 = vsel %vm724, %v916, %v917
        %v919 = vrot.slane %v912, 7
        %v920 = vsel %vm724, %v917, %v919
        %v924 = vsub.f32 %v852, %v916
        %v925 = vsub.f32 %v853, %v918
        %v926 = vsub.f32 %v854, %v920
        %v927 = vsel %vm653, %v924, -1e+30
        %v928 = vsel %vm654, %v925, -1e+30
        %v929 = vsel %vm655, %v926, -1e+30
        %v933 = vrot.slane %v927, 1
        %v934 = vrot.slane %v928, 1
        %v935 = vsel %vm662, %v933, %v934
        %v936 = vrot.slane %v929, 1
        %v937 = vsel %vm662, %v934, %v936
        %v941 = vmax.f32 %v927, %v935
        %v942 = vmax.f32 %v928, %v937
        %v943 = vmax.f32 %v929, %v936
        %v944 = vrot.slane %v927, 2
        %v945 = vrot.slane %v928, 2
        %v946 = vsel %vm674, %v944, %v945
        %v947 = vrot.slane %v929, 2
        %v948 = vsel %vm674, %v945, %v947
        %v952 = vmax.f32 %v941, %v946
        %v953 = vmax.f32 %v942, %v948
        %v954 = vmax.f32 %v943, %v947
        %v955 = vrot.slane %v927, 3
        %v956 = vrot.slane %v928, 3
        %v957 = vsel %vm764, %v955, %v956
        %v958 = vrot.slane %v929, 3
        %v959 = vsel %vm764, %v956, %v958
        %v963 = vmax.f32 %v952, %v957
        %v964 = vmax.f32 %v953, %v959
        %v965 = vmax.f32 %v954, %v958
        %v966 = vrot.slane %v927, 4
        %v967 = vrot.slane %v928, 4
        %v968 = vsel %vm776, %v966, %v967
        %v969 = vrot.slane %v929, 4
        %v970 = vsel %vm776, %v967, %v969
        %v974 = vmax.f32 %v963, %v968
        %v975 = vmax.f32 %v964, %v970
        %v976 = vmax.f32 %v965, %v969
        %979 = vrot.lane.b32.xlu0 %v974, 127
        %v980 = vpop.permute.xlu0 %979
        %981 = vrot.lane.b32.xlu0 %v975, 127
        %v982 = vpop.permute.xlu0 %981
        %v985 = vsel %vm698, %v980, -1e+30
        %v986 = vsel %vm698, %v982, -1e+30
        %v987 = vmax.f32 %v974, %v985
        %v988 = vmax.f32 %v975, %v986
        %v990 = vrot.slane %v974, 1
        %v991 = vrot.slane %v975, 1
        %v992 = vsel %vm662, %v990, %v991
        %v993 = vrot.slane %v976, 1
        %v994 = vsel %vm662, %v991, %v993
        %995 = vrot.lane.b32.xlu0 %v992, 1
        %v996 = vpop.permute.xlu0 %995
        %997 = vrot.lane.b32.xlu0 %v994, 1
        %v998 = vpop.permute.xlu0 %997
        %v1001 = vsel %vm714, -1e+30, %v996
        %v1002 = vsel %vm714, -1e+30, %v998
        %v1005 = vrot.slane %v1001, 7
        %v1006 = vrot.slane %v1002, 7
        %v1007 = vsel %vm724, %v1005, %v1006
        %v1010 = vmax.f32 %v987, %v1005
        %v1011 = vmax.f32 %v988, %v1007
        %1012 = vrot.lane.b32.xlu0 %v974, 126
        %v1013 = vpop.permute.xlu0 %1012
        %1014 = vrot.lane.b32.xlu0 %v975, 126
        %v1015 = vpop.permute.xlu0 %1014
        %v1018 = vsel %vm829, %v1013, -1e+30
        %v1019 = vsel %vm829, %v1015, -1e+30
        %v1020 = vmax.f32 %v1010, %v1018
        %v1021 = vmax.f32 %v1011, %v1019
        %1022 = vrot.lane.b32.xlu0 %v992, 2
        %v1023 = vpop.permute.xlu0 %1022
        %1024 = vrot.lane.b32.xlu0 %v994, 2
        %v1025 = vpop.permute.xlu0 %1024
        %v1028 = vsel %vm840, -1e+30, %v1023
        %v1029 = vsel %vm840, -1e+30, %v1025
        %v1032 = vrot.slane %v1028, 7
        %v1033 = vrot.slane %v1029, 7
        %v1034 = vsel %vm724, %v1032, %v1033
        %v1037 = vmax.f32 %v1020, %v1032
        %v1038 = vmax.f32 %v1021, %v1034
        %vm1041 = vcmask 1041408
        %v1042 = vrot.slane %v1037, 6
        %v1043 = vrot.slane %v1038, 6
        %v1044 = vsel %vm1041, %v1042, %v1043
        %v1046 = vmul.f32 %v737, %v1044
        %vm1047 = vcmask 130048
        %v1048 = vsel %vm1047, %v1046, 0.0
        %v1049 = vrot.slane %v1048, 4
        %v1050 = vadd.f32 %v1048, %v1049
        %v1051 = vrot.slane %v1050, 2
        %v1052 = vadd.f32 %v1050, %v1051
        %v1053 = vrot.slane %v1052, 1
        %v1054 = vadd.f32 %v1052, %v1053
        %v1055 = vsel %vm1047, %v737, 0.0
        %v1056 = vrot.slane %v1055, 4
        %v1057 = vadd.f32 %v1055, %v1056
        %v1058 = vrot.slane %v1057, 2
        %v1059 = vadd.f32 %v1057, %v1058
        %v1060 = vrot.slane %v1059, 1
        %v1061 = vadd.f32 %v1059, %v1060
        %v1063 = vmul.f32 %v850, %v945
        %v1064 = vmul.f32 %v851, %v945
        %v1067 = vrot.slane %v1063, 6
        %v1068 = vrot.slane %v1064, 6
        %v1069 = vsel %vm1041, %v1067, %v1068
        %v1071 = vsel %vm1047, %v1069, 0.0
        %v1072 = vrot.slane %v1071, 4
        %v1073 = vadd.f32 %v1071, %v1072
        %v1074 = vrot.slane %v1073, 2
        %v1075 = vadd.f32 %v1073, %v1074
        %v1076 = vrot.slane %v1075, 1
        %v1077 = vadd.f32 %v1075, %v1076
        %v1078 = vsel %vm1047, %v928, 0.0
        %v1079 = vrot.slane %v1078, 4
        %v1080 = vadd.f32 %v1078, %v1079
        %v1081 = vrot.slane %v1080, 2
        %v1082 = vadd.f32 %v1080, %v1081
        %v1083 = vrot.slane %v1082, 1
        %v1084 = vadd.f32 %v1082, %v1083
        %v1085 = vsel %vm724, %v1054, %v1061
        %v1086 = vsel %vm1041, %v1085, %v1077
        %vm1087 = vcmask 1042432
        %v1088 = vsel %vm1087, %v1086, %v1084
        %vm1089 = vcmask 125952
        %1090 = vst.msk [vmem:[%s531] sm:$0xf] %vm1089, %v1088
        %v1091 = vmul.f32 %v590, %v623
        %v1092 = vmul.f32 %v592, %v625
        %v1093 = vmul.f32 %v594, %v627
        %v1094 = vsel %vm653, %v1091, 1e+30
        %v1095 = vsel %vm654, %v1092, 1e+30
        %v1096 = vsel %vm655, %v1093, 1e+30
        %v1100 = vrot.slane %v1094, 1
        %v1101 = vrot.slane %v1095, 1
        %v1102 = vsel %vm662, %v1100, %v1101
        %v1103 = vrot.slane %v1096, 1
        %v1104 = vsel %vm662, %v1101, %v1103
        %v1108 = vmin.f32 %v1094, %v1102
        %v1109 = vmin.f32 %v1095, %v1104
        %v1110 = vmin.f32 %v1096, %v1103
        %v1111 = vrot.slane %v1094, 2
        %v1112 = vrot.slane %v1095, 2
        %v1113 = vsel %vm674, %v1111, %v1112
        %v1114 = vrot.slane %v1096, 2
        %v1115 = vsel %vm674, %v1112, %v1114
        %v1119 = vmin.f32 %v1108, %v1113
        %v1120 = vmin.f32 %v1109, %v1115
        %v1121 = vmin.f32 %v1110, %v1114
        %1125 = vrot.lane.b32.xlu0 %v1119, 127
        %v1126 = vpop.permute.xlu0 %1125
        %1127 = vrot.lane.b32.xlu0 %v1120, 127
        %v1128 = vpop.permute.xlu0 %1127
        %1129 = vrot.lane.b32.xlu0 %v1121, 127
        %v1130 = vpop.permute.xlu0 %1129
        %v1134 = vsel %vm698, %v1126, 1e+30
        %v1135 = vsel %vm698, %v1128, 1e+30
        %v1136 = vsel %vm698, %v1130, 1e+30
        %v1137 = vmin.f32 %v1119, %v1134
        %v1138 = vmin.f32 %v1120, %v1135
        %v1139 = vmin.f32 %v1121, %v1136
        %1140 = vrot.lane.b32.xlu0 %v1119, 1
        %v1141 = vpop.permute.xlu0 %1140
        %1142 = vrot.lane.b32.xlu0 %v1120, 1
        %v1143 = vpop.permute.xlu0 %1142
        %1144 = vrot.lane.b32.xlu0 %v1121, 1
        %v1145 = vpop.permute.xlu0 %1144
        %v1149 = vsel %vm714, 1e+30, %v1141
        %v1150 = vsel %vm714, 1e+30, %v1143
        %v1151 = vsel %vm714, 1e+30, %v1145
        %v1152 = vmin.f32 %v1137, %v1149
        %v1153 = vmin.f32 %v1138, %v1150
        %v1154 = vmin.f32 %v1139, %v1151
        %v1158 = vrot.slane %v1152, 7
        %v1159 = vrot.slane %v1153, 7
        %v1160 = vsel %vm724, %v1158, %v1159
        %v1161 = vrot.slane %v1154, 7
        %v1162 = vsel %vm724, %v1159, %v1161
        %v1166 = vsub.f32 %v1094, %v1158
        %v1167 = vsub.f32 %v1095, %v1160
        %v1168 = vsub.f32 %v1096, %v1162
        %v1169 = vsel %vm653, %v1166, -1e+30
        %v1170 = vsel %vm654, %v1167, -1e+30
        %v1171 = vsel %vm655, %v1168, -1e+30
        %v1175 = vrot.slane %v1169, 1
        %v1176 = vrot.slane %v1170, 1
        %v1177 = vsel %vm662, %v1175, %v1176
        %v1178 = vrot.slane %v1171, 1
        %v1179 = vsel %vm662, %v1176, %v1178
        %v1183 = vmax.f32 %v1169, %v1177
        %v1184 = vmax.f32 %v1170, %v1179
        %v1185 = vmax.f32 %v1171, %v1178
        %v1186 = vrot.slane %v1169, 2
        %v1187 = vrot.slane %v1170, 2
        %v1188 = vsel %vm674, %v1186, %v1187
        %v1189 = vrot.slane %v1171, 2
        %v1190 = vsel %vm674, %v1187, %v1189
        %v1194 = vmax.f32 %v1183, %v1188
        %v1195 = vmax.f32 %v1184, %v1190
        %v1196 = vmax.f32 %v1185, %v1189
        %v1197 = vrot.slane %v1169, 3
        %v1198 = vrot.slane %v1170, 3
        %v1199 = vsel %vm764, %v1197, %v1198
        %v1200 = vrot.slane %v1171, 3
        %v1201 = vsel %vm764, %v1198, %v1200
        %v1205 = vmax.f32 %v1194, %v1199
        %v1206 = vmax.f32 %v1195, %v1201
        %v1207 = vmax.f32 %v1196, %v1200
        %v1208 = vrot.slane %v1169, 4
        %v1209 = vrot.slane %v1170, 4
        %v1210 = vsel %vm776, %v1208, %v1209
        %v1211 = vrot.slane %v1171, 4
        %v1212 = vsel %vm776, %v1209, %v1211
        %v1216 = vmax.f32 %v1205, %v1210
        %v1217 = vmax.f32 %v1206, %v1212
        %v1218 = vmax.f32 %v1207, %v1211
        %1221 = vrot.lane.b32.xlu0 %v1216, 127
        %v1222 = vpop.permute.xlu0 %1221
        %1223 = vrot.lane.b32.xlu0 %v1217, 127
        %v1224 = vpop.permute.xlu0 %1223
        %v1227 = vsel %vm698, %v1222, -1e+30
        %v1228 = vsel %vm698, %v1224, -1e+30
        %v1229 = vmax.f32 %v1216, %v1227
        %v1230 = vmax.f32 %v1217, %v1228
        %v1232 = vrot.slane %v1216, 1
        %v1233 = vrot.slane %v1217, 1
        %v1234 = vsel %vm662, %v1232, %v1233
        %v1235 = vrot.slane %v1218, 1
        %v1236 = vsel %vm662, %v1233, %v1235
        %1237 = vrot.lane.b32.xlu0 %v1234, 1
        %v1238 = vpop.permute.xlu0 %1237
        %1239 = vrot.lane.b32.xlu0 %v1236, 1
        %v1240 = vpop.permute.xlu0 %1239
        %v1243 = vsel %vm714, -1e+30, %v1238
        %v1244 = vsel %vm714, -1e+30, %v1240
        %v1247 = vrot.slane %v1243, 7
        %v1248 = vrot.slane %v1244, 7
        %v1249 = vsel %vm724, %v1247, %v1248
        %v1252 = vmax.f32 %v1229, %v1247
        %v1253 = vmax.f32 %v1230, %v1249
        %1254 = vrot.lane.b32.xlu0 %v1216, 126
        %v1255 = vpop.permute.xlu0 %1254
        %1256 = vrot.lane.b32.xlu0 %v1217, 126
        %v1257 = vpop.permute.xlu0 %1256
        %v1260 = vsel %vm829, %v1255, -1e+30
        %v1261 = vsel %vm829, %v1257, -1e+30
        %v1262 = vmax.f32 %v1252, %v1260
        %v1263 = vmax.f32 %v1253, %v1261
        %1264 = vrot.lane.b32.xlu0 %v1234, 2
        %v1265 = vpop.permute.xlu0 %1264
        %1266 = vrot.lane.b32.xlu0 %v1236, 2
        %v1267 = vpop.permute.xlu0 %1266
        %v1270 = vsel %vm840, -1e+30, %v1265
        %v1271 = vsel %vm840, -1e+30, %v1267
        %v1274 = vrot.slane %v1270, 7
        %v1275 = vrot.slane %v1271, 7
        %v1276 = vsel %vm724, %v1274, %v1275
        %v1279 = vmax.f32 %v1262, %v1274
        %v1280 = vmax.f32 %v1263, %v1276
        %v1281 = vsel %vm653, %v557, 1e+30
        %v1282 = vsel %vm654, %v561, 1e+30
        %v1283 = vsel %vm655, %v565, 1e+30
        %v1287 = vrot.slane %v1281, 1
        %v1288 = vrot.slane %v1282, 1
        %v1289 = vsel %vm662, %v1287, %v1288
        %v1290 = vrot.slane %v1283, 1
        %v1291 = vsel %vm662, %v1288, %v1290
        %v1295 = vmin.f32 %v1281, %v1289
        %v1296 = vmin.f32 %v1282, %v1291
        %v1297 = vmin.f32 %v1283, %v1290
        %v1298 = vrot.slane %v1281, 2
        %v1299 = vrot.slane %v1282, 2
        %v1300 = vsel %vm674, %v1298, %v1299
        %v1301 = vrot.slane %v1283, 2
        %v1302 = vsel %vm674, %v1299, %v1301
        %v1306 = vmin.f32 %v1295, %v1300
        %v1307 = vmin.f32 %v1296, %v1302
        %v1308 = vmin.f32 %v1297, %v1301
        %1312 = vrot.lane.b32.xlu0 %v1306, 127
        %v1313 = vpop.permute.xlu0 %1312
        %1314 = vrot.lane.b32.xlu0 %v1307, 127
        %v1315 = vpop.permute.xlu0 %1314
        %1316 = vrot.lane.b32.xlu0 %v1308, 127
        %v1317 = vpop.permute.xlu0 %1316
        %v1321 = vsel %vm698, %v1313, 1e+30
        %v1322 = vsel %vm698, %v1315, 1e+30
        %v1323 = vsel %vm698, %v1317, 1e+30
        %v1324 = vmin.f32 %v1306, %v1321
        %v1325 = vmin.f32 %v1307, %v1322
        %v1326 = vmin.f32 %v1308, %v1323
        %1327 = vrot.lane.b32.xlu0 %v1306, 1
        %v1328 = vpop.permute.xlu0 %1327
        %1329 = vrot.lane.b32.xlu0 %v1307, 1
        %v1330 = vpop.permute.xlu0 %1329
        %1331 = vrot.lane.b32.xlu0 %v1308, 1
        %v1332 = vpop.permute.xlu0 %1331
        %v1336 = vsel %vm714, 1e+30, %v1328
        %v1337 = vsel %vm714, 1e+30, %v1330
        %v1338 = vsel %vm714, 1e+30, %v1332
        %v1339 = vmin.f32 %v1324, %v1336
        %v1340 = vmin.f32 %v1325, %v1337
        %v1341 = vmin.f32 %v1326, %v1338
        %v1345 = vrot.slane %v1339, 7
        %v1346 = vrot.slane %v1340, 7
        %v1347 = vsel %vm724, %v1345, %v1346
        %v1348 = vrot.slane %v1341, 7
        %v1349 = vsel %vm724, %v1346, %v1348
        %v1353 = vsub.f32 %v1281, %v1345
        %v1354 = vsub.f32 %v1282, %v1347
        %v1355 = vsub.f32 %v1283, %v1349
        %v1356 = vsel %vm653, %v1353, -1e+30
        %v1357 = vsel %vm654, %v1354, -1e+30
        %v1358 = vsel %vm655, %v1355, -1e+30
        %v1362 = vrot.slane %v1356, 1
        %v1363 = vrot.slane %v1357, 1
        %v1364 = vsel %vm662, %v1362, %v1363
        %v1365 = vrot.slane %v1358, 1
        %v1366 = vsel %vm662, %v1363, %v1365
        %v1370 = vmax.f32 %v1356, %v1364
        %v1371 = vmax.f32 %v1357, %v1366
        %v1372 = vmax.f32 %v1358, %v1365
        %v1373 = vrot.slane %v1356, 2
        %v1374 = vrot.slane %v1357, 2
        %v1375 = vsel %vm674, %v1373, %v1374
        %v1376 = vrot.slane %v1358, 2
        %v1377 = vsel %vm674, %v1374, %v1376
        %v1381 = vmax.f32 %v1370, %v1375
        %v1382 = vmax.f32 %v1371, %v1377
        %v1383 = vmax.f32 %v1372, %v1376
        %v1384 = vrot.slane %v1356, 3
        %v1385 = vrot.slane %v1357, 3
        %v1386 = vsel %vm764, %v1384, %v1385
        %v1387 = vrot.slane %v1358, 3
        %v1388 = vsel %vm764, %v1385, %v1387
        %v1392 = vmax.f32 %v1381, %v1386
        %v1393 = vmax.f32 %v1382, %v1388
        %v1394 = vmax.f32 %v1383, %v1387
        %v1395 = vrot.slane %v1356, 4
        %v1396 = vrot.slane %v1357, 4
        %v1397 = vsel %vm776, %v1395, %v1396
        %v1398 = vrot.slane %v1358, 4
        %v1399 = vsel %vm776, %v1396, %v1398
        %v1403 = vmax.f32 %v1392, %v1397
        %v1404 = vmax.f32 %v1393, %v1399
        %v1405 = vmax.f32 %v1394, %v1398
        %1408 = vrot.lane.b32.xlu0 %v1403, 127
        %v1409 = vpop.permute.xlu0 %1408
        %1410 = vrot.lane.b32.xlu0 %v1404, 127
        %v1411 = vpop.permute.xlu0 %1410
        %v1414 = vsel %vm698, %v1409, -1e+30
        %v1415 = vsel %vm698, %v1411, -1e+30
        %v1416 = vmax.f32 %v1403, %v1414
        %v1417 = vmax.f32 %v1404, %v1415
        %v1419 = vrot.slane %v1403, 1
        %v1420 = vrot.slane %v1404, 1
        %v1421 = vsel %vm662, %v1419, %v1420
        %v1422 = vrot.slane %v1405, 1
        %v1423 = vsel %vm662, %v1420, %v1422
        %1424 = vrot.lane.b32.xlu0 %v1421, 1
        %v1425 = vpop.permute.xlu0 %1424
        %1426 = vrot.lane.b32.xlu0 %v1423, 1
        %v1427 = vpop.permute.xlu0 %1426
        %v1430 = vsel %vm714, -1e+30, %v1425
        %v1431 = vsel %vm714, -1e+30, %v1427
        %v1434 = vrot.slane %v1430, 7
        %v1435 = vrot.slane %v1431, 7
        %v1436 = vsel %vm724, %v1434, %v1435
        %v1439 = vmax.f32 %v1416, %v1434
        %v1440 = vmax.f32 %v1417, %v1436
        %1441 = vrot.lane.b32.xlu0 %v1403, 126
        %v1442 = vpop.permute.xlu0 %1441
        %1443 = vrot.lane.b32.xlu0 %v1404, 126
        %v1444 = vpop.permute.xlu0 %1443
        %v1447 = vsel %vm829, %v1442, -1e+30
        %v1448 = vsel %vm829, %v1444, -1e+30
        %v1449 = vmax.f32 %v1439, %v1447
        %v1450 = vmax.f32 %v1440, %v1448
        %1451 = vrot.lane.b32.xlu0 %v1421, 2
        %v1452 = vpop.permute.xlu0 %1451
        %1453 = vrot.lane.b32.xlu0 %v1423, 2
        %v1454 = vpop.permute.xlu0 %1453
        %v1457 = vsel %vm840, -1e+30, %v1452
        %v1458 = vsel %vm840, -1e+30, %v1454
        %v1461 = vrot.slane %v1457, 7
        %v1462 = vrot.slane %v1458, 7
        %v1463 = vsel %vm724, %v1461, %v1462
        %v1466 = vmax.f32 %v1449, %v1461
        %v1467 = vmax.f32 %v1450, %v1463
        %v1470 = vrot.slane %v1466, 6
        %v1471 = vrot.slane %v1467, 6
        %v1472 = vsel %vm1041, %v1470, %v1471
        %v1474 = vmul.f32 %v1170, %v1472
        %v1475 = vsel %vm1047, %v1474, 0.0
        %v1476 = vrot.slane %v1475, 4
        %v1477 = vadd.f32 %v1475, %v1476
        %v1478 = vrot.slane %v1477, 2
        %v1479 = vadd.f32 %v1477, %v1478
        %v1480 = vrot.slane %v1479, 1
        %v1481 = vadd.f32 %v1479, %v1480
        %v1482 = vsel %vm1047, %v1170, 0.0
        %v1483 = vrot.slane %v1482, 4
        %v1484 = vadd.f32 %v1482, %v1483
        %v1485 = vrot.slane %v1484, 2
        %v1486 = vadd.f32 %v1484, %v1485
        %v1487 = vrot.slane %v1486, 1
        %v1488 = vadd.f32 %v1486, %v1487
        %v1490 = vmul.f32 %v1279, %v1374
        %v1491 = vmul.f32 %v1280, %v1374
        %v1494 = vrot.slane %v1490, 6
        %v1495 = vrot.slane %v1491, 6
        %v1496 = vsel %vm1041, %v1494, %v1495
        %v1498 = vsel %vm1047, %v1496, 0.0
        %v1499 = vrot.slane %v1498, 4
        %v1500 = vadd.f32 %v1498, %v1499
        %v1501 = vrot.slane %v1500, 2
        %v1502 = vadd.f32 %v1500, %v1501
        %v1503 = vrot.slane %v1502, 1
        %v1504 = vadd.f32 %v1502, %v1503
        %v1505 = vsel %vm1047, %v1357, 0.0
        %v1506 = vrot.slane %v1505, 4
        %v1507 = vadd.f32 %v1505, %v1506
        %v1508 = vrot.slane %v1507, 2
        %v1509 = vadd.f32 %v1507, %v1508
        %v1510 = vrot.slane %v1509, 1
        %v1511 = vadd.f32 %v1509, %v1510
        %v1512 = vsel %vm724, %v1481, %v1488
        %v1513 = vsel %vm1041, %v1512, %v1504
        %v1514 = vsel %vm1087, %v1513, %v1511
        %s1515 = scalar_lea.vmem %s531, 4 [#allocation13]
        %1516 = vst.msk [vmem:[%s1515] sm:$0xf] %vm1089, %v1514
        %v1517 = vmul.f32 %v602, %v623
        %v1518 = vmul.f32 %v604, %v625
        %v1519 = vmul.f32 %v606, %v627
        %v1520 = vsel %vm653, %v1517, 1e+30
        %v1521 = vsel %vm654, %v1518, 1e+30
        %v1522 = vsel %vm655, %v1519, 1e+30
        %v1526 = vrot.slane %v1520, 1
        %v1527 = vrot.slane %v1521, 1
        %v1528 = vsel %vm662, %v1526, %v1527
        %v1529 = vrot.slane %v1522, 1
        %v1530 = vsel %vm662, %v1527, %v1529
        %v1534 = vmin.f32 %v1520, %v1528
        %v1535 = vmin.f32 %v1521, %v1530
        %v1536 = vmin.f32 %v1522, %v1529
        %v1537 = vrot.slane %v1520, 2
        %v1538 = vrot.slane %v1521, 2
        %v1539 = vsel %vm674, %v1537, %v1538
        %v1540 = vrot.slane %v1522, 2
        %v1541 = vsel %vm674, %v1538, %v1540
        %v1545 = vmin.f32 %v1534, %v1539
        %v1546 = vmin.f32 %v1535, %v1541
        %v1547 = vmin.f32 %v1536, %v1540
        %1551 = vrot.lane.b32.xlu0 %v1545, 127
        %v1552 = vpop.permute.xlu0 %1551
        %1553 = vrot.lane.b32.xlu0 %v1546, 127
        %v1554 = vpop.permute.xlu0 %1553
        %1555 = vrot.lane.b32.xlu0 %v1547, 127
        %v1556 = vpop.permute.xlu0 %1555
        %v1560 = vsel %vm698, %v1552, 1e+30
        %v1561 = vsel %vm698, %v1554, 1e+30
        %v1562 = vsel %vm698, %v1556, 1e+30
        %v1563 = vmin.f32 %v1545, %v1560
        %v1564 = vmin.f32 %v1546, %v1561
        %v1565 = vmin.f32 %v1547, %v1562
        %1566 = vrot.lane.b32.xlu0 %v1545, 1
        %v1567 = vpop.permute.xlu0 %1566
        %1568 = vrot.lane.b32.xlu0 %v1546, 1
        %v1569 = vpop.permute.xlu0 %1568
        %1570 = vrot.lane.b32.xlu0 %v1547, 1
        %v1571 = vpop.permute.xlu0 %1570
        %v1575 = vsel %vm714, 1e+30, %v1567
        %v1576 = vsel %vm714, 1e+30, %v1569
        %v1577 = vsel %vm714, 1e+30, %v1571
        %v1578 = vmin.f32 %v1563, %v1575
        %v1579 = vmin.f32 %v1564, %v1576
        %v1580 = vmin.f32 %v1565, %v1577
        %v1584 = vrot.slane %v1578, 7
        %v1585 = vrot.slane %v1579, 7
        %v1586 = vsel %vm724, %v1584, %v1585
        %v1587 = vrot.slane %v1580, 7
        %v1588 = vsel %vm724, %v1585, %v1587
        %v1592 = vsub.f32 %v1520, %v1584
        %v1593 = vsub.f32 %v1521, %v1586
        %v1594 = vsub.f32 %v1522, %v1588
        %v1595 = vsel %vm653, %v1592, -1e+30
        %v1596 = vsel %vm654, %v1593, -1e+30
        %v1597 = vsel %vm655, %v1594, -1e+30
        %v1601 = vrot.slane %v1595, 1
        %v1602 = vrot.slane %v1596, 1
        %v1603 = vsel %vm662, %v1601, %v1602
        %v1604 = vrot.slane %v1597, 1
        %v1605 = vsel %vm662, %v1602, %v1604
        %v1609 = vmax.f32 %v1595, %v1603
        %v1610 = vmax.f32 %v1596, %v1605
        %v1611 = vmax.f32 %v1597, %v1604
        %v1612 = vrot.slane %v1595, 2
        %v1613 = vrot.slane %v1596, 2
        %v1614 = vsel %vm674, %v1612, %v1613
        %v1615 = vrot.slane %v1597, 2
        %v1616 = vsel %vm674, %v1613, %v1615
        %v1620 = vmax.f32 %v1609, %v1614
        %v1621 = vmax.f32 %v1610, %v1616
        %v1622 = vmax.f32 %v1611, %v1615
        %v1623 = vrot.slane %v1595, 3
        %v1624 = vrot.slane %v1596, 3
        %v1625 = vsel %vm764, %v1623, %v1624
        %v1626 = vrot.slane %v1597, 3
        %v1627 = vsel %vm764, %v1624, %v1626
        %v1631 = vmax.f32 %v1620, %v1625
        %v1632 = vmax.f32 %v1621, %v1627
        %v1633 = vmax.f32 %v1622, %v1626
        %v1634 = vrot.slane %v1595, 4
        %v1635 = vrot.slane %v1596, 4
        %v1636 = vsel %vm776, %v1634, %v1635
        %v1637 = vrot.slane %v1597, 4
        %v1638 = vsel %vm776, %v1635, %v1637
        %v1642 = vmax.f32 %v1631, %v1636
        %v1643 = vmax.f32 %v1632, %v1638
        %v1644 = vmax.f32 %v1633, %v1637
        %1647 = vrot.lane.b32.xlu0 %v1642, 127
        %v1648 = vpop.permute.xlu0 %1647
        %1649 = vrot.lane.b32.xlu0 %v1643, 127
        %v1650 = vpop.permute.xlu0 %1649
        %v1653 = vsel %vm698, %v1648, -1e+30
        %v1654 = vsel %vm698, %v1650, -1e+30
        %v1655 = vmax.f32 %v1642, %v1653
        %v1656 = vmax.f32 %v1643, %v1654
        %v1658 = vrot.slane %v1642, 1
        %v1659 = vrot.slane %v1643, 1
        %v1660 = vsel %vm662, %v1658, %v1659
        %v1661 = vrot.slane %v1644, 1
        %v1662 = vsel %vm662, %v1659, %v1661
        %1663 = vrot.lane.b32.xlu0 %v1660, 1
        %v1664 = vpop.permute.xlu0 %1663
        %1665 = vrot.lane.b32.xlu0 %v1662, 1
        %v1666 = vpop.permute.xlu0 %1665
        %v1669 = vsel %vm714, -1e+30, %v1664
        %v1670 = vsel %vm714, -1e+30, %v1666
        %v1673 = vrot.slane %v1669, 7
        %v1674 = vrot.slane %v1670, 7
        %v1675 = vsel %vm724, %v1673, %v1674
        %v1678 = vmax.f32 %v1655, %v1673
        %v1679 = vmax.f32 %v1656, %v1675
        %1680 = vrot.lane.b32.xlu0 %v1642, 126
        %v1681 = vpop.permute.xlu0 %1680
        %1682 = vrot.lane.b32.xlu0 %v1643, 126
        %v1683 = vpop.permute.xlu0 %1682
        %v1686 = vsel %vm829, %v1681, -1e+30
        %v1687 = vsel %vm829, %v1683, -1e+30
        %v1688 = vmax.f32 %v1678, %v1686
        %v1689 = vmax.f32 %v1679, %v1687
        %1690 = vrot.lane.b32.xlu0 %v1660, 2
        %v1691 = vpop.permute.xlu0 %1690
        %1692 = vrot.lane.b32.xlu0 %v1662, 2
        %v1693 = vpop.permute.xlu0 %1692
        %v1696 = vsel %vm840, -1e+30, %v1691
        %v1697 = vsel %vm840, -1e+30, %v1693
        %v1700 = vrot.slane %v1696, 7
        %v1701 = vrot.slane %v1697, 7
        %v1702 = vsel %vm724, %v1700, %v1701
        %v1705 = vmax.f32 %v1688, %v1700
        %v1706 = vmax.f32 %v1689, %v1702
        %v1707 = vsel %vm653, %v558, 1e+30
        %v1708 = vsel %vm654, %v562, 1e+30
        %v1709 = vsel %vm655, %v566, 1e+30
        %v1713 = vrot.slane %v1707, 1
        %v1714 = vrot.slane %v1708, 1
        %v1715 = vsel %vm662, %v1713, %v1714
        %v1716 = vrot.slane %v1709, 1
        %v1717 = vsel %vm662, %v1714, %v1716
        %v1721 = vmin.f32 %v1707, %v1715
        %v1722 = vmin.f32 %v1708, %v1717
        %v1723 = vmin.f32 %v1709, %v1716
        %v1724 = vrot.slane %v1707, 2
        %v1725 = vrot.slane %v1708, 2
        %v1726 = vsel %vm674, %v1724, %v1725
        %v1727 = vrot.slane %v1709, 2
        %v1728 = vsel %vm674, %v1725, %v1727
        %v1732 = vmin.f32 %v1721, %v1726
        %v1733 = vmin.f32 %v1722, %v1728
        %v1734 = vmin.f32 %v1723, %v1727
        %1738 = vrot.lane.b32.xlu0 %v1732, 127
        %v1739 = vpop.permute.xlu0 %1738
        %1740 = vrot.lane.b32.xlu0 %v1733, 127
        %v1741 = vpop.permute.xlu0 %1740
        %1742 = vrot.lane.b32.xlu0 %v1734, 127
        %v1743 = vpop.permute.xlu0 %1742
        %v1747 = vsel %vm698, %v1739, 1e+30
        %v1748 = vsel %vm698, %v1741, 1e+30
        %v1749 = vsel %vm698, %v1743, 1e+30
        %v1750 = vmin.f32 %v1732, %v1747
        %v1751 = vmin.f32 %v1733, %v1748
        %v1752 = vmin.f32 %v1734, %v1749
        %1753 = vrot.lane.b32.xlu0 %v1732, 1
        %v1754 = vpop.permute.xlu0 %1753
        %1755 = vrot.lane.b32.xlu0 %v1733, 1
        %v1756 = vpop.permute.xlu0 %1755
        %1757 = vrot.lane.b32.xlu0 %v1734, 1
        %v1758 = vpop.permute.xlu0 %1757
        %v1762 = vsel %vm714, 1e+30, %v1754
        %v1763 = vsel %vm714, 1e+30, %v1756
        %v1764 = vsel %vm714, 1e+30, %v1758
        %v1765 = vmin.f32 %v1750, %v1762
        %v1766 = vmin.f32 %v1751, %v1763
        %v1767 = vmin.f32 %v1752, %v1764
        %v1771 = vrot.slane %v1765, 7
        %v1772 = vrot.slane %v1766, 7
        %v1773 = vsel %vm724, %v1771, %v1772
        %v1774 = vrot.slane %v1767, 7
        %v1775 = vsel %vm724, %v1772, %v1774
        %v1779 = vsub.f32 %v1707, %v1771
        %v1780 = vsub.f32 %v1708, %v1773
        %v1781 = vsub.f32 %v1709, %v1775
        %v1782 = vsel %vm653, %v1779, -1e+30
        %v1783 = vsel %vm654, %v1780, -1e+30
        %v1784 = vsel %vm655, %v1781, -1e+30
        %v1788 = vrot.slane %v1782, 1
        %v1789 = vrot.slane %v1783, 1
        %v1790 = vsel %vm662, %v1788, %v1789
        %v1791 = vrot.slane %v1784, 1
        %v1792 = vsel %vm662, %v1789, %v1791
        %v1796 = vmax.f32 %v1782, %v1790
        %v1797 = vmax.f32 %v1783, %v1792
        %v1798 = vmax.f32 %v1784, %v1791
        %v1799 = vrot.slane %v1782, 2
        %v1800 = vrot.slane %v1783, 2
        %v1801 = vsel %vm674, %v1799, %v1800
        %v1802 = vrot.slane %v1784, 2
        %v1803 = vsel %vm674, %v1800, %v1802
        %v1807 = vmax.f32 %v1796, %v1801
        %v1808 = vmax.f32 %v1797, %v1803
        %v1809 = vmax.f32 %v1798, %v1802
        %v1810 = vrot.slane %v1782, 3
        %v1811 = vrot.slane %v1783, 3
        %v1812 = vsel %vm764, %v1810, %v1811
        %v1813 = vrot.slane %v1784, 3
        %v1814 = vsel %vm764, %v1811, %v1813
        %v1818 = vmax.f32 %v1807, %v1812
        %v1819 = vmax.f32 %v1808, %v1814
        %v1820 = vmax.f32 %v1809, %v1813
        %v1821 = vrot.slane %v1782, 4
        %v1822 = vrot.slane %v1783, 4
        %v1823 = vsel %vm776, %v1821, %v1822
        %v1824 = vrot.slane %v1784, 4
        %v1825 = vsel %vm776, %v1822, %v1824
        %v1829 = vmax.f32 %v1818, %v1823
        %v1830 = vmax.f32 %v1819, %v1825
        %v1831 = vmax.f32 %v1820, %v1824
        %1834 = vrot.lane.b32.xlu0 %v1829, 127
        %v1835 = vpop.permute.xlu0 %1834
        %1836 = vrot.lane.b32.xlu0 %v1830, 127
        %v1837 = vpop.permute.xlu0 %1836
        %v1840 = vsel %vm698, %v1835, -1e+30
        %v1841 = vsel %vm698, %v1837, -1e+30
        %v1842 = vmax.f32 %v1829, %v1840
        %v1843 = vmax.f32 %v1830, %v1841
        %v1845 = vrot.slane %v1829, 1
        %v1846 = vrot.slane %v1830, 1
        %v1847 = vsel %vm662, %v1845, %v1846
        %v1848 = vrot.slane %v1831, 1
        %v1849 = vsel %vm662, %v1846, %v1848
        %1850 = vrot.lane.b32.xlu0 %v1847, 1
        %v1851 = vpop.permute.xlu0 %1850
        %1852 = vrot.lane.b32.xlu0 %v1849, 1
        %v1853 = vpop.permute.xlu0 %1852
        %v1856 = vsel %vm714, -1e+30, %v1851
        %v1857 = vsel %vm714, -1e+30, %v1853
        %v1860 = vrot.slane %v1856, 7
        %v1861 = vrot.slane %v1857, 7
        %v1862 = vsel %vm724, %v1860, %v1861
        %v1865 = vmax.f32 %v1842, %v1860
        %v1866 = vmax.f32 %v1843, %v1862
        %1867 = vrot.lane.b32.xlu0 %v1829, 126
        %v1868 = vpop.permute.xlu0 %1867
        %1869 = vrot.lane.b32.xlu0 %v1830, 126
        %v1870 = vpop.permute.xlu0 %1869
        %v1873 = vsel %vm829, %v1868, -1e+30
        %v1874 = vsel %vm829, %v1870, -1e+30
        %v1875 = vmax.f32 %v1865, %v1873
        %v1876 = vmax.f32 %v1866, %v1874
        %1877 = vrot.lane.b32.xlu0 %v1847, 2
        %v1878 = vpop.permute.xlu0 %1877
        %1879 = vrot.lane.b32.xlu0 %v1849, 2
        %v1880 = vpop.permute.xlu0 %1879
        %v1883 = vsel %vm840, -1e+30, %v1878
        %v1884 = vsel %vm840, -1e+30, %v1880
        %v1887 = vrot.slane %v1883, 7
        %v1888 = vrot.slane %v1884, 7
        %v1889 = vsel %vm724, %v1887, %v1888
        %v1892 = vmax.f32 %v1875, %v1887
        %v1893 = vmax.f32 %v1876, %v1889
        %v1896 = vrot.slane %v1892, 6
        %v1897 = vrot.slane %v1893, 6
        %v1898 = vsel %vm1041, %v1896, %v1897
        %v1900 = vmul.f32 %v1596, %v1898
        %v1901 = vsel %vm1047, %v1900, 0.0
        %v1902 = vrot.slane %v1901, 4
        %v1903 = vadd.f32 %v1901, %v1902
        %v1904 = vrot.slane %v1903, 2
        %v1905 = vadd.f32 %v1903, %v1904
        %v1906 = vrot.slane %v1905, 1
        %v1907 = vadd.f32 %v1905, %v1906
        %v1908 = vsel %vm1047, %v1596, 0.0
        %v1909 = vrot.slane %v1908, 4
        %v1910 = vadd.f32 %v1908, %v1909
        %v1911 = vrot.slane %v1910, 2
        %v1912 = vadd.f32 %v1910, %v1911
        %v1913 = vrot.slane %v1912, 1
        %v1914 = vadd.f32 %v1912, %v1913
        %v1916 = vmul.f32 %v1705, %v1800
        %v1917 = vmul.f32 %v1706, %v1800
        %v1920 = vrot.slane %v1916, 6
        %v1921 = vrot.slane %v1917, 6
        %v1922 = vsel %vm1041, %v1920, %v1921
        %v1924 = vsel %vm1047, %v1922, 0.0
        %v1925 = vrot.slane %v1924, 4
        %v1926 = vadd.f32 %v1924, %v1925
        %v1927 = vrot.slane %v1926, 2
        %v1928 = vadd.f32 %v1926, %v1927
        %v1929 = vrot.slane %v1928, 1
        %v1930 = vadd.f32 %v1928, %v1929
        %v1931 = vsel %vm1047, %v1783, 0.0
        %v1932 = vrot.slane %v1931, 4
        %v1933 = vadd.f32 %v1931, %v1932
        %v1934 = vrot.slane %v1933, 2
        %v1935 = vadd.f32 %v1933, %v1934
        %v1936 = vrot.slane %v1935, 1
        %v1937 = vadd.f32 %v1935, %v1936
        %v1938 = vsel %vm724, %v1907, %v1914
        %v1939 = vsel %vm1041, %v1938, %v1930
        %v1940 = vsel %vm1087, %v1939, %v1937
        %s1941 = scalar_lea.vmem %s531, 8 [#allocation13]
        %1942 = vst.msk [vmem:[%s1941] sm:$0xf] %vm1089, %v1940
        %v1943 = vmul.f32 %v614, %v623
        %v1944 = vmul.f32 %v616, %v625
        %v1945 = vmul.f32 %v618, %v627
        %v1946 = vsel %vm653, %v1943, 1e+30
        %v1947 = vsel %vm654, %v1944, 1e+30
        %v1948 = vsel %vm655, %v1945, 1e+30
        %v1952 = vrot.slane %v1946, 1
        %v1953 = vrot.slane %v1947, 1
        %v1954 = vsel %vm662, %v1952, %v1953
        %v1955 = vrot.slane %v1948, 1
        %v1956 = vsel %vm662, %v1953, %v1955
        %v1960 = vmin.f32 %v1946, %v1954
        %v1961 = vmin.f32 %v1947, %v1956
        %v1962 = vmin.f32 %v1948, %v1955
        %v1963 = vrot.slane %v1946, 2
        %v1964 = vrot.slane %v1947, 2
        %v1965 = vsel %vm674, %v1963, %v1964
        %v1966 = vrot.slane %v1948, 2
        %v1967 = vsel %vm674, %v1964, %v1966
        %v1971 = vmin.f32 %v1960, %v1965
        %v1972 = vmin.f32 %v1961, %v1967
        %v1973 = vmin.f32 %v1962, %v1966
        %1977 = vrot.lane.b32.xlu0 %v1971, 127
        %v1978 = vpop.permute.xlu0 %1977
        %1979 = vrot.lane.b32.xlu0 %v1972, 127
        %v1980 = vpop.permute.xlu0 %1979
        %1981 = vrot.lane.b32.xlu0 %v1973, 127
        %v1982 = vpop.permute.xlu0 %1981
        %v1986 = vsel %vm698, %v1978, 1e+30
        %v1987 = vsel %vm698, %v1980, 1e+30
        %v1988 = vsel %vm698, %v1982, 1e+30
        %v1989 = vmin.f32 %v1971, %v1986
        %v1990 = vmin.f32 %v1972, %v1987
        %v1991 = vmin.f32 %v1973, %v1988
        %1992 = vrot.lane.b32.xlu0 %v1971, 1
        %v1993 = vpop.permute.xlu0 %1992
        %1994 = vrot.lane.b32.xlu0 %v1972, 1
        %v1995 = vpop.permute.xlu0 %1994
        %1996 = vrot.lane.b32.xlu0 %v1973, 1
        %v1997 = vpop.permute.xlu0 %1996
        %v2001 = vsel %vm714, 1e+30, %v1993
        %v2002 = vsel %vm714, 1e+30, %v1995
        %v2003 = vsel %vm714, 1e+30, %v1997
        %v2004 = vmin.f32 %v1989, %v2001
        %v2005 = vmin.f32 %v1990, %v2002
        %v2006 = vmin.f32 %v1991, %v2003
        %v2010 = vrot.slane %v2004, 7
        %v2011 = vrot.slane %v2005, 7
        %v2012 = vsel %vm724, %v2010, %v2011
        %v2013 = vrot.slane %v2006, 7
        %v2014 = vsel %vm724, %v2011, %v2013
        %v2018 = vsub.f32 %v1946, %v2010
        %v2019 = vsub.f32 %v1947, %v2012
        %v2020 = vsub.f32 %v1948, %v2014
        %v2021 = vsel %vm653, %v2018, -1e+30
        %v2022 = vsel %vm654, %v2019, -1e+30
        %v2023 = vsel %vm655, %v2020, -1e+30
        %v2027 = vrot.slane %v2021, 1
        %v2028 = vrot.slane %v2022, 1
        %v2029 = vsel %vm662, %v2027, %v2028
        %v2030 = vrot.slane %v2023, 1
        %v2031 = vsel %vm662, %v2028, %v2030
        %v2035 = vmax.f32 %v2021, %v2029
        %v2036 = vmax.f32 %v2022, %v2031
        %v2037 = vmax.f32 %v2023, %v2030
        %v2038 = vrot.slane %v2021, 2
        %v2039 = vrot.slane %v2022, 2
        %v2040 = vsel %vm674, %v2038, %v2039
        %v2041 = vrot.slane %v2023, 2
        %v2042 = vsel %vm674, %v2039, %v2041
        %v2046 = vmax.f32 %v2035, %v2040
        %v2047 = vmax.f32 %v2036, %v2042
        %v2048 = vmax.f32 %v2037, %v2041
        %v2049 = vrot.slane %v2021, 3
        %v2050 = vrot.slane %v2022, 3
        %v2051 = vsel %vm764, %v2049, %v2050
        %v2052 = vrot.slane %v2023, 3
        %v2053 = vsel %vm764, %v2050, %v2052
        %v2057 = vmax.f32 %v2046, %v2051
        %v2058 = vmax.f32 %v2047, %v2053
        %v2059 = vmax.f32 %v2048, %v2052
        %v2060 = vrot.slane %v2021, 4
        %v2061 = vrot.slane %v2022, 4
        %v2062 = vsel %vm776, %v2060, %v2061
        %v2063 = vrot.slane %v2023, 4
        %v2064 = vsel %vm776, %v2061, %v2063
        %v2068 = vmax.f32 %v2057, %v2062
        %v2069 = vmax.f32 %v2058, %v2064
        %v2070 = vmax.f32 %v2059, %v2063
        %2073 = vrot.lane.b32.xlu0 %v2068, 127
        %v2074 = vpop.permute.xlu0 %2073
        %2075 = vrot.lane.b32.xlu0 %v2069, 127
        %v2076 = vpop.permute.xlu0 %2075
        %v2079 = vsel %vm698, %v2074, -1e+30
        %v2080 = vsel %vm698, %v2076, -1e+30
        %v2081 = vmax.f32 %v2068, %v2079
        %v2082 = vmax.f32 %v2069, %v2080
        %v2084 = vrot.slane %v2068, 1
        %v2085 = vrot.slane %v2069, 1
        %v2086 = vsel %vm662, %v2084, %v2085
        %v2087 = vrot.slane %v2070, 1
        %v2088 = vsel %vm662, %v2085, %v2087
        %2089 = vrot.lane.b32.xlu0 %v2086, 1
        %v2090 = vpop.permute.xlu0 %2089
        %2091 = vrot.lane.b32.xlu0 %v2088, 1
        %v2092 = vpop.permute.xlu0 %2091
        %v2095 = vsel %vm714, -1e+30, %v2090
        %v2096 = vsel %vm714, -1e+30, %v2092
        %v2099 = vrot.slane %v2095, 7
        %v2100 = vrot.slane %v2096, 7
        %v2101 = vsel %vm724, %v2099, %v2100
        %v2104 = vmax.f32 %v2081, %v2099
        %v2105 = vmax.f32 %v2082, %v2101
        %2106 = vrot.lane.b32.xlu0 %v2068, 126
        %v2107 = vpop.permute.xlu0 %2106
        %2108 = vrot.lane.b32.xlu0 %v2069, 126
        %v2109 = vpop.permute.xlu0 %2108
        %v2112 = vsel %vm829, %v2107, -1e+30
        %v2113 = vsel %vm829, %v2109, -1e+30
        %v2114 = vmax.f32 %v2104, %v2112
        %v2115 = vmax.f32 %v2105, %v2113
        %2116 = vrot.lane.b32.xlu0 %v2086, 2
        %v2117 = vpop.permute.xlu0 %2116
        %2118 = vrot.lane.b32.xlu0 %v2088, 2
        %v2119 = vpop.permute.xlu0 %2118
        %v2122 = vsel %vm840, -1e+30, %v2117
        %v2123 = vsel %vm840, -1e+30, %v2119
        %v2126 = vrot.slane %v2122, 7
        %v2127 = vrot.slane %v2123, 7
        %v2128 = vsel %vm724, %v2126, %v2127
        %v2131 = vmax.f32 %v2114, %v2126
        %v2132 = vmax.f32 %v2115, %v2128
        %v2133 = vsel %vm653, %v559, 1e+30
        %v2134 = vsel %vm654, %v563, 1e+30
        %v2135 = vsel %vm655, %v567, 1e+30
        %v2139 = vrot.slane %v2133, 1
        %v2140 = vrot.slane %v2134, 1
        %v2141 = vsel %vm662, %v2139, %v2140
        %v2142 = vrot.slane %v2135, 1
        %v2143 = vsel %vm662, %v2140, %v2142
        %v2147 = vmin.f32 %v2133, %v2141
        %v2148 = vmin.f32 %v2134, %v2143
        %v2149 = vmin.f32 %v2135, %v2142
        %v2150 = vrot.slane %v2133, 2
        %v2151 = vrot.slane %v2134, 2
        %v2152 = vsel %vm674, %v2150, %v2151
        %v2153 = vrot.slane %v2135, 2
        %v2154 = vsel %vm674, %v2151, %v2153
        %v2158 = vmin.f32 %v2147, %v2152
        %v2159 = vmin.f32 %v2148, %v2154
        %v2160 = vmin.f32 %v2149, %v2153
        %2164 = vrot.lane.b32.xlu0 %v2158, 127
        %v2165 = vpop.permute.xlu0 %2164
        %2166 = vrot.lane.b32.xlu0 %v2159, 127
        %v2167 = vpop.permute.xlu0 %2166
        %2168 = vrot.lane.b32.xlu0 %v2160, 127
        %v2169 = vpop.permute.xlu0 %2168
        %v2173 = vsel %vm698, %v2165, 1e+30
        %v2174 = vsel %vm698, %v2167, 1e+30
        %v2175 = vsel %vm698, %v2169, 1e+30
        %v2176 = vmin.f32 %v2158, %v2173
        %v2177 = vmin.f32 %v2159, %v2174
        %v2178 = vmin.f32 %v2160, %v2175
        %2179 = vrot.lane.b32.xlu0 %v2158, 1
        %v2180 = vpop.permute.xlu0 %2179
        %2181 = vrot.lane.b32.xlu0 %v2159, 1
        %v2182 = vpop.permute.xlu0 %2181
        %2183 = vrot.lane.b32.xlu0 %v2160, 1
        %v2184 = vpop.permute.xlu0 %2183
        %v2188 = vsel %vm714, 1e+30, %v2180
        %v2189 = vsel %vm714, 1e+30, %v2182
        %v2190 = vsel %vm714, 1e+30, %v2184
        %v2191 = vmin.f32 %v2176, %v2188
        %v2192 = vmin.f32 %v2177, %v2189
        %v2193 = vmin.f32 %v2178, %v2190
        %v2197 = vrot.slane %v2191, 7
        %v2198 = vrot.slane %v2192, 7
        %v2199 = vsel %vm724, %v2197, %v2198
        %v2200 = vrot.slane %v2193, 7
        %v2201 = vsel %vm724, %v2198, %v2200
        %v2205 = vsub.f32 %v2133, %v2197
        %v2206 = vsub.f32 %v2134, %v2199
        %v2207 = vsub.f32 %v2135, %v2201
        %v2208 = vsel %vm653, %v2205, -1e+30
        %v2209 = vsel %vm654, %v2206, -1e+30
        %v2210 = vsel %vm655, %v2207, -1e+30
        %v2214 = vrot.slane %v2208, 1
        %v2215 = vrot.slane %v2209, 1
        %v2216 = vsel %vm662, %v2214, %v2215
        %v2217 = vrot.slane %v2210, 1
        %v2218 = vsel %vm662, %v2215, %v2217
        %v2222 = vmax.f32 %v2208, %v2216
        %v2223 = vmax.f32 %v2209, %v2218
        %v2224 = vmax.f32 %v2210, %v2217
        %v2225 = vrot.slane %v2208, 2
        %v2226 = vrot.slane %v2209, 2
        %v2227 = vsel %vm674, %v2225, %v2226
        %v2228 = vrot.slane %v2210, 2
        %v2229 = vsel %vm674, %v2226, %v2228
        %v2233 = vmax.f32 %v2222, %v2227
        %v2234 = vmax.f32 %v2223, %v2229
        %v2235 = vmax.f32 %v2224, %v2228
        %v2236 = vrot.slane %v2208, 3
        %v2237 = vrot.slane %v2209, 3
        %v2238 = vsel %vm764, %v2236, %v2237
        %v2239 = vrot.slane %v2210, 3
        %v2240 = vsel %vm764, %v2237, %v2239
        %v2244 = vmax.f32 %v2233, %v2238
        %v2245 = vmax.f32 %v2234, %v2240
        %v2246 = vmax.f32 %v2235, %v2239
        %v2247 = vrot.slane %v2208, 4
        %v2248 = vrot.slane %v2209, 4
        %v2249 = vsel %vm776, %v2247, %v2248
        %v2250 = vrot.slane %v2210, 4
        %v2251 = vsel %vm776, %v2248, %v2250
        %v2255 = vmax.f32 %v2244, %v2249
        %v2256 = vmax.f32 %v2245, %v2251
        %v2257 = vmax.f32 %v2246, %v2250
        %2260 = vrot.lane.b32.xlu0 %v2255, 127
        %v2261 = vpop.permute.xlu0 %2260
        %2262 = vrot.lane.b32.xlu0 %v2256, 127
        %v2263 = vpop.permute.xlu0 %2262
        %v2266 = vsel %vm698, %v2261, -1e+30
        %v2267 = vsel %vm698, %v2263, -1e+30
        %v2268 = vmax.f32 %v2255, %v2266
        %v2269 = vmax.f32 %v2256, %v2267
        %v2271 = vrot.slane %v2255, 1
        %v2272 = vrot.slane %v2256, 1
        %v2273 = vsel %vm662, %v2271, %v2272
        %v2274 = vrot.slane %v2257, 1
        %v2275 = vsel %vm662, %v2272, %v2274
        %2276 = vrot.lane.b32.xlu0 %v2273, 1
        %v2277 = vpop.permute.xlu0 %2276
        %2278 = vrot.lane.b32.xlu0 %v2275, 1
        %v2279 = vpop.permute.xlu0 %2278
        %v2282 = vsel %vm714, -1e+30, %v2277
        %v2283 = vsel %vm714, -1e+30, %v2279
        %v2286 = vrot.slane %v2282, 7
        %v2287 = vrot.slane %v2283, 7
        %v2288 = vsel %vm724, %v2286, %v2287
        %v2291 = vmax.f32 %v2268, %v2286
        %v2292 = vmax.f32 %v2269, %v2288
        %2293 = vrot.lane.b32.xlu0 %v2255, 126
        %v2294 = vpop.permute.xlu0 %2293
        %2295 = vrot.lane.b32.xlu0 %v2256, 126
        %v2296 = vpop.permute.xlu0 %2295
        %v2299 = vsel %vm829, %v2294, -1e+30
        %v2300 = vsel %vm829, %v2296, -1e+30
        %v2301 = vmax.f32 %v2291, %v2299
        %v2302 = vmax.f32 %v2292, %v2300
        %2303 = vrot.lane.b32.xlu0 %v2273, 2
        %v2304 = vpop.permute.xlu0 %2303
        %2305 = vrot.lane.b32.xlu0 %v2275, 2
        %v2306 = vpop.permute.xlu0 %2305
        %v2309 = vsel %vm840, -1e+30, %v2304
        %v2310 = vsel %vm840, -1e+30, %v2306
        %v2313 = vrot.slane %v2309, 7
        %v2314 = vrot.slane %v2310, 7
        %v2315 = vsel %vm724, %v2313, %v2314
        %v2318 = vmax.f32 %v2301, %v2313
        %v2319 = vmax.f32 %v2302, %v2315
        %v2322 = vrot.slane %v2318, 6
        %v2323 = vrot.slane %v2319, 6
        %v2324 = vsel %vm1041, %v2322, %v2323
        %v2326 = vmul.f32 %v2022, %v2324
        %v2327 = vsel %vm1047, %v2326, 0.0
        %v2328 = vrot.slane %v2327, 4
        %v2329 = vadd.f32 %v2327, %v2328
        %v2330 = vrot.slane %v2329, 2
        %v2331 = vadd.f32 %v2329, %v2330
        %v2332 = vrot.slane %v2331, 1
        %v2333 = vadd.f32 %v2331, %v2332
        %v2334 = vsel %vm1047, %v2022, 0.0
        %v2335 = vrot.slane %v2334, 4
        %v2336 = vadd.f32 %v2334, %v2335
        %v2337 = vrot.slane %v2336, 2
        %v2338 = vadd.f32 %v2336, %v2337
        %v2339 = vrot.slane %v2338, 1
        %v2340 = vadd.f32 %v2338, %v2339
        %v2342 = vmul.f32 %v2131, %v2226
        %v2343 = vmul.f32 %v2132, %v2226
        %v2346 = vrot.slane %v2342, 6
        %v2347 = vrot.slane %v2343, 6
        %v2348 = vsel %vm1041, %v2346, %v2347
        %v2350 = vsel %vm1047, %v2348, 0.0
        %v2351 = vrot.slane %v2350, 4
        %v2352 = vadd.f32 %v2350, %v2351
        %v2353 = vrot.slane %v2352, 2
        %v2354 = vadd.f32 %v2352, %v2353
        %v2355 = vrot.slane %v2354, 1
        %v2356 = vadd.f32 %v2354, %v2355
        %v2357 = vsel %vm1047, %v2209, 0.0
        %v2358 = vrot.slane %v2357, 4
        %v2359 = vadd.f32 %v2357, %v2358
        %v2360 = vrot.slane %v2359, 2
        %v2361 = vadd.f32 %v2359, %v2360
        %v2362 = vrot.slane %v2361, 1
        %v2363 = vadd.f32 %v2361, %v2362
        %v2364 = vsel %vm724, %v2333, %v2340
        %v2365 = vsel %vm1041, %v2364, %v2356
        %v2366 = vsel %vm1087, %v2365, %v2363
        %s2367 = scalar_lea.vmem %s531, 12 [#allocation13]
        %2368 = vst.msk [vmem:[%s2367] sm:$0xf] %vm1089, %v2366
        %s2369 = sand.u32 %s246, 1
        %s2370 = scalar_lea.sflag [#allocation4], %s2369
        %s2371 = sand.u32 %s246, 1
        %s2372 = smul.addr %s2371, 16
        %s2373 = scalar_lea.vmem [#allocation13], %s2372
        // Predicated region
        $region69: #{tpu_custom_call.1} parent=43 // pred_check
          %p2374 = pneg %p256
        $region70: #{tpu_custom_call.1} parent=43 // pred_check_branch
          %2376 = sbr.rel (%p2374) target = $region72
        $region71: #{tpu_custom_call.1} parent=43 // pred_region
          %s2378 = ssub.s32 256, 256
          %2379 = vsyncadd %s2370, %s2378
          %s2380 = smul.addr %s37, 4
          %s2381 = smul.addr %s36, 8
          %s2382 = sadd.s32 %s2380, %s2381
          %s2383 = smul.addr %s2382, 64
          %s2384 = scalar_lea.hbm %s6, %s2383
          %s2385 = sshll.u32 %s2373, 4
          %s2386 = int_to_ptr.vmem [resolvable:$true] %s2385
          %2391 = dma.vmem_to_hbm [thread:$0]  %s2386, 256, %s2384, %s2370, 64, 64, 4
        $region72: #{tpu_custom_call.1} parent=43 // pred_fallthru
          _
      $region44: #{tpu_custom_call.1} parent=5 // pred_fallthru
        _
      %p2392 = scmp.le.s32.totalorder 2, %s27
      // Predicated region
      $region73: #{tpu_custom_call.1} parent=5 // pred_check
        %p2393 = pneg %p2392
      $region74: #{tpu_custom_call.1} parent=5 // pred_check_branch
        %2395 = sbr.rel (%p2393) target = $region76
      $region75: #{tpu_custom_call.1} parent=5 // pred_region
        %s2396 = ssub.s32 %s27, 2
        // Predicated region
        $region77: #{tpu_custom_call.1} parent=75 // pred_check
          %p2397 = pneg %p262
        $region78: #{tpu_custom_call.1} parent=75 // pred_check_branch
          %2399 = sbr.rel (%p2397) target = $region80
        $region79: #{tpu_custom_call.1} parent=75 // pred_region
          %s2400 = sand.u32 %s247, 1
          %s2401 = scalar_lea.sflag [#allocation4], %s2400
          %s2402 = sand.u32 %s247, 1
          %s2403 = smul.addr %s2402, 16
          %s2404 = scalar_lea.vmem [#allocation13], %s2403
          %2405 = dma.done %s2401, 256
        $region80: #{tpu_custom_call.1} parent=75 // pred_fallthru
          _
      $region76: #{tpu_custom_call.1} parent=5 // pred_fallthru
        _
    $region6: #{tpu_custom_call.1} parent=1 // loop_footer
      %s31 = sadd.s32 1, %s27
    $region7: #{tpu_custom_call.1} parent=1 // loop_footer_branch
      %26 = sbr.rel target = $region3
    $region8: #{tpu_custom_call.1} parent=1 // loop_exit
      _
    %2406 = vsyncpa [#allocation3], 1
    %s2407 = scalar_lea.sflag [#allocation3], 1
    %2408 = vsyncpa %s2407, 1
    %2409 = vsyncpa [#allocation6], 1
    %s2410 = scalar_lea.sflag [#allocation6], 1
    %2411 = vsyncpa %s2410, 1
    %2412 = vsyncpa [#allocation9], 1
    %s2413 = scalar_lea.sflag [#allocation9], 1
    %2414 = vsyncpa %s2413, 1
    %2415 = vsyncpa [#allocation12], 1
    %s2416 = scalar_lea.sflag [#allocation12], 1
    %2417 = vsyncpa %s2416, 1
    %2418 = vsyncpa [#allocation4], 1
    %s2419 = scalar_lea.sflag [#allocation4], 1
    %2420 = vsyncpa %s2419, 1

</llo_original>
